<compile_context>
chip_gen: v6e
topology: v6e:2x2x1
jax: 0.10.0
libtpu: 0.0.40
codegen_flags: <defaults>
</compile_context>

<pallas_src>
import functools

import numpy as np
import jax
import jax.numpy as jnp
from jax import lax
from jax.experimental import pallas as pl
from jax.experimental.pallas import tpu as pltpu


def _round_up(x, m):
    return ((x + m - 1) // m) * m


def _target_cout_tile(cout):
    """Cout tile width: 256 feeds the 2x256x256 MXU on v6e/v7x; 128 on v5-class
    chips (128x128 MXU) or when Cout itself is tiny."""
    if cout <= 128:
        return 128
    try:
        kind = jax.devices()[0].device_kind.lower()
    except Exception:
        kind = ""
    if "v5" in kind or "v4" in kind or "v3" in kind:
        return 128
    return 256


def _vmem_capacity_bytes():
    try:
        return int(pltpu.get_tpu_info().vmem_capacity_bytes)
    except Exception:
        pass
    try:
        if "v7" in jax.devices()[0].device_kind.lower():
            return 64 * 1024 * 1024
    except Exception:
        pass
    return 128 * 1024 * 1024


# ---------------------------------------------------------------------------
# Pallas kernel
# ---------------------------------------------------------------------------
def _expander_conv_kernel(x_ref, w_ref, o_ref, col_ref, *,
                          ksz_h, ksz_w, dil, stride, cin, oh, owp, g, k_real):
    """One grid step: one image x one Cout tile.

    x_ref:   (Hq, s, Wq, s*Cin)   f32   zero-padded, space-to-depth input
    w_ref:   (K_pad, TN)          bf16  pre-masked expander weights
    o_ref:   (OH_pad, OWP, TN)    f32   conv output (stride / trim already applied)
    col_ref: (OH_pad, OWP, K_pad) bf16  im2col scratch (persists across Cout tiles)
    """
    oh_pad, _, k_pad = col_ref.shape
    tn = w_ref.shape[1]

    # ---- build the im2col scratch once per image (first Cout tile only) ------
    @pl.when(pl.program_id(1) == 0)
    def _fill_im2col():
        # Zero only the padding regions (uninitialized VMEM could hold NaN/Inf,
        # and 0-weight * NaN = NaN); the real rows/columns are fully overwritten
        # by the tap copies below.
        if k_pad > k_real:
            col_ref[:, :, k_real:] = jnp.zeros(
                (oh_pad, owp, k_pad - k_real), jnp.bfloat16)
        if oh_pad > oh:
            col_ref[oh:, :, :] = jnp.zeros(
                (oh_pad - oh, owp, k_pad), jnp.bfloat16)
        # One contiguous block-slice copy per conv tap (stride folded into the
        # space-to-depth layout, so no per-output-row loop is needed).
        for kh in range(ksz_h):
            for kw in range(ksz_w):
                hh, ww = kh * dil, kw * dil
                hq0, r = hh // stride, hh % stride
                wq0, c0 = ww // stride, (ww % stride) * cin
                k0 = (kh * ksz_w + kw) * cin
                src = x_ref[hq0:hq0 + oh, r, wq0:wq0 + owp, c0:c0 + cin]
                col_ref[0:oh, :, k0:k0 + cin] = src.astype(jnp.bfloat16)

    # ---- big-K matmuls, tiled over output-row groups, streamed to o_ref ------
    n_g = oh_pad // g

    def _dot_rows(i):
        lhs = col_ref[pl.ds(i * g, g), :, :].reshape(g * owp, k_pad)
        out = jnp.dot(lhs, w_ref[...], preferred_element_type=jnp.float32)
        o_ref[pl.ds(i * g, g), :, :] = out.reshape(g, owp, tn)

    if n_g == 1:
        _dot_rows(0)
    else:
        def _dot_step(i, carry):
            _dot_rows(i)
            return carry
        lax.fori_loop(0, n_g, _dot_step, 0)


# ---------------------------------------------------------------------------
# Wrapper
# ---------------------------------------------------------------------------
def expander_conv2d_pallas(x, weight, mask, *, stride=1, padding=0, dilation=1,
                           groups=1):
    """x: (N, Cin, H, W) f32; weight/mask: (Cout, Cin, KH, KW) f32. Returns NCHW."""
    if groups != 1:
        raise NotImplementedError("groups != 1 not supported")  # TODO(synk)

    N, Cin, H, W = x.shape
    Cout, Cin_w, KH, KW = weight.shape
    assert Cin_w == Cin
    s, p, d = int(stride), int(padding), int(dilation)

    Hp, Wp = H + 2 * p, W + 2 * p
    OH = (Hp - d * (KH - 1) - 1) // s + 1
    OW = (Wp - d * (KW - 1) - 1) // s + 1
    assert OH > 0 and OW > 0

    # ---- Cout tiling (generation-aware, lane-dense output) -------------------
    TN = _target_cout_tile(Cout)
    Np_ = _round_up(Cout, TN)

    # ---- weights: fold mask once, (KH,KW,Cin,Cout) -> (K_pad, Np_) bf16 ------
    # TODO(synk): cache/hoist this packing across calls (weights are static).
    K_real = KH * KW * Cin
    K_pad = _round_up(K_real, 128)
    w = jnp.transpose((weight * mask).astype(jnp.bfloat16), (2, 3, 1, 0))
    w = w.reshape(K_real, Cout)
    w = jnp.pad(w, ((0, K_pad - K_real), (0, Np_ - Cout)))

    # ---- input: NCHW -> NHWC, zero-pad, space-to-depth reshape (free) --------
    # TODO(synk): NHWC-native callers can skip the two layout transposes; input
    #             could also be stored bf16 in HBM to halve input DMA bytes.
    OWP = _round_up(OW, 8)                       # lane-friendly output-row pitch
    Cq = s * Cin
    Wq = _round_up(max(-(-Wp // s), OWP + (d * (KW - 1)) // s), 8)
    Hq = max(-(-Hp // s), OH + (d * (KH - 1)) // s)
    xh = jnp.transpose(x, (0, 2, 3, 1))
    xh = jnp.pad(xh, ((0, 0), (p, Hq * s - H - p), (p, Wq * s - W - p), (0, 0)))
    x5 = xh.reshape(N, Hq, s, Wq, Cq)            # pure reshape, no data movement

    # ---- output-row grouping for the in-kernel dot loop ----------------------
    G = max(1, min(OH, max(1, 256 // OWP)))      # ~128-512 matmul rows per dot
    OH_pad = _round_up(OH, G)

    # ---- VMEM accounting: 128-lane padding + 2x double buffering -------------
    lane = lambda n: _round_up(n, 128)
    x_blk = Hq * s * Wq * lane(Cq) * 4
    w_blk = K_pad * lane(TN) * 2
    o_blk = OH_pad * OWP * lane(TN) * 4
    col_b = OH_pad * OWP * K_pad * 2
    est = 2 * (x_blk + w_blk + o_blk) + col_b
    cap = _vmem_capacity_bytes()
    vmem_limit = min(max(32 * 1024 * 1024, int(est * 1.3) + (2 << 20)),
                     (cap * 3) // 4)
    # TODO(synk): if `est` ever exceeds the limit (huge feature maps), add an
    #             output-row-tile grid axis instead of relying on a bigger limit;
    #             that would also give >=2 parallel grid steps for N==1 on v7x.

    kernel = functools.partial(
        _expander_conv_kernel,
        ksz_h=KH, ksz_w=KW, dil=d, stride=s, cin=Cin,
        oh=OH, owp=OWP, g=G, k_real=K_real)

    outf = pl.pallas_call(
        kernel,
        out_shape=jax.ShapeDtypeStruct((N, OH_pad, OWP, Np_), jnp.float32),
        grid_spec=pltpu.PrefetchScalarGridSpec(
            num_scalar_prefetch=0,
            # Cout tiles innermost: the image block index is unchanged across the
            # inner axis (so the input is not re-fetched) and the im2col scratch
            # built at j == 0 is reused for every Cout tile.
            grid=(N, Np_ // TN),
            in_specs=[
                pl.BlockSpec((None, Hq, s, Wq, Cq), lambda b, j: (b, 0, 0, 0, 0)),
                pl.BlockSpec((K_pad, TN), lambda b, j: (0, j)),
            ],
            out_specs=pl.BlockSpec((None, OH_pad, OWP, TN),
                                   lambda b, j: (b, 0, 0, j)),
            scratch_shapes=[pltpu.VMEM((OH_pad, OWP, K_pad), jnp.bfloat16)],
        ),
        compiler_params=pltpu.CompilerParams(
            # batch steps are independent -> parallel (megacore / 2-TC v7x);
            # the Cout axis reuses the scratch filled at j == 0 -> "arbitrary".
            dimension_semantics=("parallel", "arbitrary"),
            vmem_limit_bytes=int(vmem_limit),
        ),
    )(x5, w)

    # ---- drop row/col/Cout padding, back to NCHW ------------------------------
    out = outf[:, :OH, :OW, :Cout]
    # TODO(synk): consumers wanting NHWC can skip this final transpose.
    return jnp.transpose(out, (0, 3, 1, 2))


# ---------------------------------------------------------------------------
# Deterministic parameter construction (mirrors ExpanderConv2d.__init__)
# ---------------------------------------------------------------------------
def make_expander_params(indim, outdim, kernel_size, expand_size, seed=0):
    # kaiming_normal_(mode='fan_out'): std = sqrt(2 / (outdim * k * k))
    key = jax.random.PRNGKey(seed)
    fan_out = outdim * kernel_size * kernel_size
    std = np.sqrt(2.0 / fan_out)
    weight = std * jax.random.normal(
        key, (outdim, indim, kernel_size, kernel_size), dtype=jnp.float32)

    # Expander mask (deterministic permutations via numpy RandomState).
    rng = np.random.RandomState(seed)
    mask = np.zeros((outdim, indim, 1, 1), dtype=np.float32)
    if indim > outdim:
        for i in range(outdim):
            perm = rng.permutation(indim)
            for j in range(expand_size):
                mask[i, perm[j], 0, 0] = 1.0
    else:
        for i in range(indim):
            perm = rng.permutation(outdim)
            for j in range(expand_size):
                mask[perm[j], i, 0, 0] = 1.0
    mask = np.tile(mask, (1, 1, kernel_size, kernel_size))
    return weight, jnp.asarray(mask)


# ---------------------------------------------------------------------------
if __name__ == "__main__":
    # TODO(synk): PyTorch runs this conv in f32; the kernel uses bf16 x bf16
    #             operands with f32 accumulation (MXU-native), hence the 2e-2
    #             tolerance against a bf16-rounded reference.
    configs = [
        # (Cin, Cout, H,  W,  stride, padding, dilation)
        (4,    8,   16, 16, 1, 1, 1),   # plain 3x3
        (4,    8,   16, 16, 2, 1, 1),   # stride-2 downsample (in-kernel subsample)
        (4,    8,   40, 40, 1, 2, 2),   # bigger map + dilation -> row-group dot loop
        (8,  320,   16, 16, 1, 1, 1),   # Cout > TN -> scratch reused across Cout tiles
    ]
    N, ksize, expand_size = 2, 3, 2
    key = jax.random.PRNGKey(0)

    for idx, (Cin, Cout, H, W, stride, padding, dilation) in enumerate(configs):
        kx, key = jax.random.split(key)
        x = jax.random.normal(kx, (N, Cin, H, W), dtype=jnp.float32)
        weight, mask = make_expander_params(Cin, Cout, ksize, expand_size, seed=idx)

        out = expander_conv2d_pallas(
            x, weight, mask, stride=stride, padding=padding, dilation=dilation)
        out = jax.block_until_ready(out)

        # Reference uses the same bf16-rounded operands (accumulation stays f32).
        ref = lax.conv_general_dilated(
            x.astype(jnp.bfloat16), (weight * mask).astype(jnp.bfloat16),
            window_strides=(stride, stride),
            padding=[(padding, padding), (padding, padding)],
            rhs_dilation=(dilation, dilation),
            dimension_numbers=("NCHW", "OIHW", "NCHW"),
            preferred_element_type=jnp.float32,
        )
        assert out.shape == ref.shape, (out.shape, ref.shape)
        max_err = float(jnp.max(jnp.abs(out - ref)))
        assert jnp.allclose(out, ref, atol=2e-2, rtol=2e-2), (
            f"config {idx} mismatch vs reference conv, max_err={max_err}")

    print("KERNEL_OK")
</pallas_src>

<mosaic_0001>
module attributes {stable_mosaic.version = 11 : i64} {
  func.func @_expander_conv_kernel(%arg0: i32, %arg1: i32, %arg2: memref<1x18x1x24x4xf32, #tpu.memory_space<vmem>>, %arg3: memref<128x128xbf16, #tpu.memory_space<vmem>>, %arg4: memref<1x16x16x128xf32, #tpu.memory_space<vmem>>, %arg5: memref<16x16x128xbf16, #tpu.memory_space<vmem>>) attributes {dimension_semantics = [#tpu.dimension_semantics<parallel>, #tpu.dimension_semantics<arbitrary>], iteration_bounds = array<i64: 2, 1>, scalar_prefetch = 0 : i64, scratch_operands = 1 : i64, tpu.core_type = #tpu.core_type<tc>, window_params = [{transform_indices = @transform_0, window_bounds = array<i64: 1, 18, 1, 24, 4>}, {transform_indices = @transform_1, window_bounds = array<i64: 128, 128>}, {transform_indices = @transform_2, window_bounds = array<i64: 1, 16, 16, 128>}]} {
    %c0_i32 = arith.constant 0 : i32
    %0 = arith.cmpi eq, %arg1, %c0_i32 : i32
    %1 = arith.extui %0 : i1 to i32
    %c0_i32_0 = arith.constant 0 : i32
    %2 = arith.cmpi ne, %1, %c0_i32_0 : i32
    scf.if %2 {
      %cst_9 = arith.constant 0.000000e+00 : bf16
      %11 = vector.broadcast %cst_9 : bf16 to vector<16x16x92xbf16>
      %c0_10 = arith.constant 0 : index
      %c0_11 = arith.constant 0 : index
      %c36 = arith.constant 36 : index
      %12 = vector.load %arg5[%c0_10, %c0_11, %c36] : memref<16x16x128xbf16, #tpu.memory_space<vmem>>, vector<16x16x92xbf16>
      tpu.vector_store %arg5[%c0_10, %c0_11, %c36], %11 {strides = array<i32>} : memref<16x16x128xbf16, #tpu.memory_space<vmem>>, vector<16x16x92xbf16>,
      %c0_12 = arith.constant 0 : index
      %c0_13 = arith.constant 0 : index
      %c0_14 = arith.constant 0 : index
      %c0_15 = arith.constant 0 : index
      %c0_16 = arith.constant 0 : index
      %13 = vector.load %arg2[%c0_12, %c0_13, %c0_14, %c0_15, %c0_16] : memref<1x18x1x24x4xf32, #tpu.memory_space<vmem>>, vector<1x16x1x16x4xf32>
      %14 = vector.shape_cast %13 : vector<1x16x1x16x4xf32> to vector<16x16x4xf32>
      %15 = arith.truncf %14 : vector<16x16x4xf32> to vector<16x16x4xbf16>
      %c0_17 = arith.constant 0 : index
      %c0_18 = arith.constant 0 : index
      %c0_19 = arith.constant 0 : index
      %16 = vector.load %arg5[%c0_17, %c0_18, %c0_19] : memref<16x16x128xbf16, #tpu.memory_space<vmem>>, vector<16x16x4xbf16>
      tpu.vector_store %arg5[%c0_17, %c0_18, %c0_19], %15 {strides = array<i32>} : memref<16x16x128xbf16, #tpu.memory_space<vmem>>, vector<16x16x4xbf16>,
      %c0_20 = arith.constant 0 : index
      %c0_21 = arith.constant 0 : index
      %c0_22 = arith.constant 0 : index
      %c1 = arith.constant 1 : index
      %c0_23 = arith.constant 0 : index
      %17 = vector.load %arg2[%c0_20, %c0_21, %c0_22, %c1, %c0_23] : memref<1x18x1x24x4xf32, #tpu.memory_space<vmem>>, vector<1x16x1x16x4xf32>
      %18 = vector.shape_cast %17 : vector<1x16x1x16x4xf32> to vector<16x16x4xf32>
      %19 = arith.truncf %18 : vector<16x16x4xf32> to vector<16x16x4xbf16>
      %c0_24 = arith.constant 0 : index
      %c0_25 = arith.constant 0 : index
      %c4 = arith.constant 4 : index
      %20 = vector.load %arg5[%c0_24, %c0_25, %c4] : memref<16x16x128xbf16, #tpu.memory_space<vmem>>, vector<16x16x4xbf16>
      tpu.vector_store %arg5[%c0_24, %c0_25, %c4], %19 {strides = array<i32>} : memref<16x16x128xbf16, #tpu.memory_space<vmem>>, vector<16x16x4xbf16>,
      %c0_26 = arith.constant 0 : index
      %c0_27 = arith.constant 0 : index
      %c0_28 = arith.constant 0 : index
      %c2 = arith.constant 2 : index
      %c0_29 = arith.constant 0 : index
      %21 = vector.load %arg2[%c0_26, %c0_27, %c0_28, %c2, %c0_29] : memref<1x18x1x24x4xf32, #tpu.memory_space<vmem>>, vector<1x16x1x16x4xf32>
      %22 = vector.shape_cast %21 : vector<1x16x1x16x4xf32> to vector<16x16x4xf32>
      %23 = arith.truncf %22 : vector<16x16x4xf32> to vector<16x16x4xbf16>
      %c0_30 = arith.constant 0 : index
      %c0_31 = arith.constant 0 : index
      %c8 = arith.constant 8 : index
      %24 = vector.load %arg5[%c0_30, %c0_31, %c8] : memref<16x16x128xbf16, #tpu.memory_space<vmem>>, vector<16x16x4xbf16>
      tpu.vector_store %arg5[%c0_30, %c0_31, %c8], %23 {strides = array<i32>} : memref<16x16x128xbf16, #tpu.memory_space<vmem>>, vector<16x16x4xbf16>,
      %c0_32 = arith.constant 0 : index
      %c1_33 = arith.constant 1 : index
      %c0_34 = arith.constant 0 : index
      %c0_35 = arith.constant 0 : index
      %c0_36 = arith.constant 0 : index
      %25 = vector.load %arg2[%c0_32, %c1_33, %c0_34, %c0_35, %c0_36] : memref<1x18x1x24x4xf32, #tpu.memory_space<vmem>>, vector<1x16x1x16x4xf32>
      %26 = vector.shape_cast %25 : vector<1x16x1x16x4xf32> to vector<16x16x4xf32>
      %27 = arith.truncf %26 : vector<16x16x4xf32> to vector<16x16x4xbf16>
      %c0_37 = arith.constant 0 : index
      %c0_38 = arith.constant 0 : index
      %c12 = arith.constant 12 : index
      %28 = vector.load %arg5[%c0_37, %c0_38, %c12] : memref<16x16x128xbf16, #tpu.memory_space<vmem>>, vector<16x16x4xbf16>
      tpu.vector_store %arg5[%c0_37, %c0_38, %c12], %27 {strides = array<i32>} : memref<16x16x128xbf16, #tpu.memory_space<vmem>>, vector<16x16x4xbf16>,
      %c0_39 = arith.constant 0 : index
      %c1_40 = arith.constant 1 : index
      %c0_41 = arith.constant 0 : index
      %c1_42 = arith.constant 1 : index
      %c0_43 = arith.constant 0 : index
      %29 = vector.load %arg2[%c0_39, %c1_40, %c0_41, %c1_42, %c0_43] : memref<1x18x1x24x4xf32, #tpu.memory_space<vmem>>, vector<1x16x1x16x4xf32>
      %30 = vector.shape_cast %29 : vector<1x16x1x16x4xf32> to vector<16x16x4xf32>
      %31 = arith.truncf %30 : vector<16x16x4xf32> to vector<16x16x4xbf16>
      %c0_44 = arith.constant 0 : index
      %c0_45 = arith.constant 0 : index
      %c16 = arith.constant 16 : index
      %32 = vector.load %arg5[%c0_44, %c0_45, %c16] : memref<16x16x128xbf16, #tpu.memory_space<vmem>>, vector<16x16x4xbf16>
      tpu.vector_store %arg5[%c0_44, %c0_45, %c16], %31 {strides = array<i32>} : memref<16x16x128xbf16, #tpu.memory_space<vmem>>, vector<16x16x4xbf16>,
      %c0_46 = arith.constant 0 : index
      %c1_47 = arith.constant 1 : index
      %c0_48 = arith.constant 0 : index
      %c2_49 = arith.constant 2 : index
      %c0_50 = arith.constant 0 : index
      %33 = vector.load %arg2[%c0_46, %c1_47, %c0_48, %c2_49, %c0_50] : memref<1x18x1x24x4xf32, #tpu.memory_space<vmem>>, vector<1x16x1x16x4xf32>
      %34 = vector.shape_cast %33 : vector<1x16x1x16x4xf32> to vector<16x16x4xf32>
      %35 = arith.truncf %34 : vector<16x16x4xf32> to vector<16x16x4xbf16>
      %c0_51 = arith.constant 0 : index
      %c0_52 = arith.constant 0 : index
      %c20 = arith.constant 20 : index
      %36 = vector.load %arg5[%c0_51, %c0_52, %c20] : memref<16x16x128xbf16, #tpu.memory_space<vmem>>, vector<16x16x4xbf16>
      tpu.vector_store %arg5[%c0_51, %c0_52, %c20], %35 {strides = array<i32>} : memref<16x16x128xbf16, #tpu.memory_space<vmem>>, vector<16x16x4xbf16>,
      %c0_53 = arith.constant 0 : index
      %c2_54 = arith.constant 2 : index
      %c0_55 = arith.constant 0 : index
      %c0_56 = arith.constant 0 : index
      %c0_57 = arith.constant 0 : index
      %37 = vector.load %arg2[%c0_53, %c2_54, %c0_55, %c0_56, %c0_57] : memref<1x18x1x24x4xf32, #tpu.memory_space<vmem>>, vector<1x16x1x16x4xf32>
      %38 = vector.shape_cast %37 : vector<1x16x1x16x4xf32> to vector<16x16x4xf32>
      %39 = arith.truncf %38 : vector<16x16x4xf32> to vector<16x16x4xbf16>
      %c0_58 = arith.constant 0 : index
      %c0_59 = arith.constant 0 : index
      %c24 = arith.constant 24 : index
      %40 = vector.load %arg5[%c0_58, %c0_59, %c24] : memref<16x16x128xbf16, #tpu.memory_space<vmem>>, vector<16x16x4xbf16>
      tpu.vector_store %arg5[%c0_58, %c0_59, %c24], %39 {strides = array<i32>} : memref<16x16x128xbf16, #tpu.memory_space<vmem>>, vector<16x16x4xbf16>,
      %c0_60 = arith.constant 0 : index
      %c2_61 = arith.constant 2 : index
      %c0_62 = arith.constant 0 : index
      %c1_63 = arith.constant 1 : index
      %c0_64 = arith.constant 0 : index
      %41 = vector.load %arg2[%c0_60, %c2_61, %c0_62, %c1_63, %c0_64] : memref<1x18x1x24x4xf32, #tpu.memory_space<vmem>>, vector<1x16x1x16x4xf32>
      %42 = vector.shape_cast %41 : vector<1x16x1x16x4xf32> to vector<16x16x4xf32>
      %43 = arith.truncf %42 : vector<16x16x4xf32> to vector<16x16x4xbf16>
      %c0_65 = arith.constant 0 : index
      %c0_66 = arith.constant 0 : index
      %c28 = arith.constant 28 : index
      %44 = vector.load %arg5[%c0_65, %c0_66, %c28] : memref<16x16x128xbf16, #tpu.memory_space<vmem>>, vector<16x16x4xbf16>
      tpu.vector_store %arg5[%c0_65, %c0_66, %c28], %43 {strides = array<i32>} : memref<16x16x128xbf16, #tpu.memory_space<vmem>>, vector<16x16x4xbf16>,
      %c0_67 = arith.constant 0 : index
      %c2_68 = arith.constant 2 : index
      %c0_69 = arith.constant 0 : index
      %c2_70 = arith.constant 2 : index
      %c0_71 = arith.constant 0 : index
      %45 = vector.load %arg2[%c0_67, %c2_68, %c0_69, %c2_70, %c0_71] : memref<1x18x1x24x4xf32, #tpu.memory_space<vmem>>, vector<1x16x1x16x4xf32>
      %46 = vector.shape_cast %45 : vector<1x16x1x16x4xf32> to vector<16x16x4xf32>
      %47 = arith.truncf %46 : vector<16x16x4xf32> to vector<16x16x4xbf16>
      %c0_72 = arith.constant 0 : index
      %c0_73 = arith.constant 0 : index
      %c32 = arith.constant 32 : index
      %48 = vector.load %arg5[%c0_72, %c0_73, %c32] : memref<16x16x128xbf16, #tpu.memory_space<vmem>>, vector<16x16x4xbf16>
      tpu.vector_store %arg5[%c0_72, %c0_73, %c32], %47 {strides = array<i32>} : memref<16x16x128xbf16, #tpu.memory_space<vmem>>, vector<16x16x4xbf16>,
    } else {
    }
    %c0 = arith.constant 0 : index
    %c0_1 = arith.constant 0 : index
    %c0_2 = arith.constant 0 : index
    %3 = vector.load %arg5[%c0, %c0_1, %c0_2] : memref<16x16x128xbf16, #tpu.memory_space<vmem>>, vector<16x16x128xbf16>
    %4 = vector.shape_cast %3 : vector<16x16x128xbf16> to vector<256x128xbf16>
    %c0_3 = arith.constant 0 : index
    %c0_4 = arith.constant 0 : index
    %5 = vector.load %arg3[%c0_3, %c0_4] : memref<128x128xbf16, #tpu.memory_space<vmem>>, vector<128x128xbf16>
    %cst = arith.constant dense<0.000000e+00> : vector<256x128xf32>
    %6 = tpu.matmul %4, %5, %cst {dimension_numbers = #tpu.dot_dimension_numbers<[1], [0], [0], [1], [0, 0, 1, 1], [], []>} : vector<256x128xbf16>, vector<128x128xbf16>, vector<256x128xf32> -> vector<256x128xf32>
    %7 = vector.shape_cast %6 : vector<256x128xf32> to vector<16x16x128xf32>
    %c0_5 = arith.constant 0 : index
    %c0_6 = arith.constant 0 : index
    %c0_7 = arith.constant 0 : index
    %c0_8 = arith.constant 0 : index
    %8 = vector.load %arg4[%c0_5, %c0_6, %c0_7, %c0_8] : memref<1x16x16x128xf32, #tpu.memory_space<vmem>>, vector<1x16x16x128xf32>
    %9 = vector.shape_cast %8 : vector<1x16x16x128xf32> to vector<16x16x128xf32>
    %10 = vector.shape_cast %7 : vector<16x16x128xf32> to vector<1x16x16x128xf32>
    tpu.vector_store %arg4[%c0_5, %c0_6, %c0_7, %c0_8], %10 {strides = array<i32>} : memref<1x16x16x128xf32, #tpu.memory_space<vmem>>, vector<1x16x16x128xf32>,
    return
  }
  func.func @transform_0(%arg0: i32, %arg1: i32) -> (i32, i32, i32, i32, i32) {
    %c0_i32 = arith.constant 0 : i32
    %c0_i32_0 = arith.constant 0 : i32
    %c0_i32_1 = arith.constant 0 : i32
    %c0_i32_2 = arith.constant 0 : i32
    %c0_i32_3 = arith.constant 0 : i32
    return %arg0, %c0_i32, %c0_i32_0, %c0_i32_1, %c0_i32_2 : i32, i32, i32, i32, i32
  }
  func.func @transform_1(%arg0: i32, %arg1: i32) -> (i32, i32) {
    %c0_i32 = arith.constant 0 : i32
    %c0_i32_0 = arith.constant 0 : i32
    return %c0_i32, %arg1 : i32, i32
  }
  func.func @transform_2(%arg0: i32, %arg1: i32) -> (i32, i32, i32, i32) {
    %c0_i32 = arith.constant 0 : i32
    %c0_i32_0 = arith.constant 0 : i32
    %c0_i32_1 = arith.constant 0 : i32
    return %arg0, %c0_i32, %c0_i32_0, %arg1 : i32, i32, i32, i32
  }
}

</mosaic_0001>

<llo_original>
// kernel: tpu_custom_call.1
$region0: #{tpu_custom_call.1}
  #allocation0 [shape = 'u32[]', space=smem, size = 0x4, offset = 0x4, fixed_abs, tag = 'smem constant byte address 0x4 - core index']
  #allocation1 [shape = 'u32[144,128]{1,0:T(1,128)}', space=vmem, size = 0x12000, scoped, tag = 'internal scratch']
  #allocation2 [shape = 'bf16[16,16,128]{2,1,0:T(8,128)(2,1)}', space=vmem, size = 0x10000, scoped, tag = 'scratch operand']
  %s0 = inlined_call_operand.vmem [shape: f32[2,18,1,24,4], index: 0, kind: input, shape index: {}]
  %s1 = inlined_call_operand.vmem [shape: bf16[128,128], index: 1, kind: input, shape index: {}]
  %s2 = inlined_call_operand.hbm [shape: f32[2,16,16,128], index: 2, kind: output, shape index: {}]
  %s3 = sld [smem:[#allocation0]]
  $region45: #{tpu_custom_call.1} parent=0
    _
  %s5 = ssub.s32 1, %s3
  %s6 = scalar_select 0, %s5, %s3
  $region1: #{tpu_custom_call.1} parent=0
    #allocation3 [shape = 'u8[262144]{0}', space=vmem, size = 0x40000, scoped, tag = 'output window, operand 0']
    #allocation4 [shape = 's32[2]{0}', space=sflag, size = 0x8, scoped, tag = 'scoped memory for tpu_custom_call.1']
    %7 = vsyncpa [#allocation4], 0
    %s8 = scalar_lea.sflag [#allocation4], 1
    %9 = vsyncpa %s8, 0
    loop: start=0, step=1, limit=4
    $region2: #{tpu_custom_call.1} parent=1 // loop_pre_header
      _
    $region3: #{tpu_custom_call.1} parent=1 // loop_header
      %s11 = sphi 0, %s15
      %p12 = scmp.ge.s32.totalorder %s11, 4
      %s18 = sphi 0, %s30
      %s19 = sphi 0, %s26
      %s20 = sphi 0, %s18
      %s21 = sphi 0, %s19
      %s22 = sphi 0, %s20
      %s23 = sphi 0, %s21
      %s33 = sphi 0, %s35
      %s36 = sphi 0, %s33
      %s37 = sphi 0, %s36
      %s53 = sphi 0, %s37
      %s59 = sphi 0, %s61
      %s62 = sphi 0, %s59
      %s63 = sphi 0, %s62
      %s79 = sphi 0, %s63
      %s87 = sphi 0, %s89
      %s90 = sphi 0, %s87
      %s91 = sphi 0, %s90
      %s107 = sphi 0, %s91
    $region4: #{tpu_custom_call.1} parent=1 // loop_header_branch
      %14 = sbr.rel (%p12) target = $region8
    $region5: #{tpu_custom_call.1} parent=1 // loop_body
      %s16 = ssub.s32 %s11, 1
      %s17 = ssub.s32 %s11, 2
      %s24 = sadd.s32 1, %s19
      %p25 = scmp.ge.s32.totalorder %s24, 1
      %s26 = scalar_select %p25, 0, %s24
      %s27 = sadd.s32 1, %s18
      %s28 = scalar_select %p25, %s27, %s18
      %p29 = scmp.ge.s32.totalorder %s28, 2
      %s30 = scalar_select %p29, 0, %s28
      %s31 = ssub.s32 %s18, %s30
      %p32 = scmp.eq.s32.totalorder %s31, 0
      %s34 = sadd.s32 %s33, 1
      %s35 = scalar_select %p32, %s33, %s34
      %p38 = pneg %p32
      %p39 = scmp.eq.s32.totalorder %s11, 1
      %p40 = por %p38, %p39
      %p41 = scmp.ne.s32.totalorder %s33, %s36
      %p42 = scmp.eq.s32.totalorder %s11, 0
      %p43 = por %p41, %p42
      %p44 = scmp.ne.s32.totalorder %s33, %s36
      %p45 = scmp.eq.s32.totalorder %s16, 1
      %p46 = por %p44, %p45
      %p47 = scmp.ne.s32.totalorder %s36, %s37
      %p48 = scmp.eq.s32.totalorder %s16, 0
      %p49 = por %p47, %p48
      %p50 = scmp.ne.s32.totalorder %s36, %s37
      %p51 = scmp.eq.s32.totalorder %s17, 1
      %p52 = por %p50, %p51
      %p54 = scmp.ne.s32.totalorder %s37, %s53
      %p55 = scmp.eq.s32.totalorder %s17, 0
      %p56 = por %p54, %p55
      %s57 = ssub.s32 %s19, %s26
      %p58 = scmp.eq.s32.totalorder %s57, 0
      %s60 = sadd.s32 %s59, 1
      %s61 = scalar_select %p58, %s59, %s60
      %p64 = pneg %p58
      %p65 = scmp.eq.s32.totalorder %s11, 1
      %p66 = por %p64, %p65
      %p67 = scmp.ne.s32.totalorder %s59, %s62
      %p68 = scmp.eq.s32.totalorder %s11, 0
      %p69 = por %p67, %p68
      %p70 = scmp.ne.s32.totalorder %s59, %s62
      %p71 = scmp.eq.s32.totalorder %s16, 1
      %p72 = por %p70, %p71
      %p73 = scmp.ne.s32.totalorder %s62, %s63
      %p74 = scmp.eq.s32.totalorder %s16, 0
      %p75 = por %p73, %p74
      %p76 = scmp.ne.s32.totalorder %s62, %s63
      %p77 = scmp.eq.s32.totalorder %s17, 1
      %p78 = por %p76, %p77
      %p80 = scmp.ne.s32.totalorder %s63, %s79
      %p81 = scmp.eq.s32.totalorder %s17, 0
      %p82 = por %p80, %p81
      %s83 = ssub.s32 %s18, %s30
      %s84 = ssub.s32 %s19, %s26
      %s85 = sor.u32 %s83, %s84
      %p86 = scmp.eq.s32.totalorder %s85, 0
      %s88 = sadd.s32 %s87, 1
      %s89 = scalar_select %p86, %s87, %s88
      %p92 = pneg %p86
      %p93 = scmp.eq.s32.totalorder %s11, 1
      %p94 = por %p92, %p93
      %p95 = scmp.ne.s32.totalorder %s87, %s90
      %p96 = scmp.eq.s32.totalorder %s11, 0
      %p97 = por %p95, %p96
      %p98 = scmp.ne.s32.totalorder %s87, %s90
      %p99 = scmp.eq.s32.totalorder %s16, 1
      %p100 = por %p98, %p99
      %p101 = scmp.ne.s32.totalorder %s90, %s91
      %p102 = scmp.eq.s32.totalorder %s16, 0
      %p103 = por %p101, %p102
      %p104 = scmp.ne.s32.totalorder %s90, %s91
      %p105 = scmp.eq.s32.totalorder %s17, 1
      %p106 = por %p104, %p105
      %p108 = scmp.ne.s32.totalorder %s91, %s107
      %p109 = scmp.eq.s32.totalorder %s17, 0
      %p110 = por %p108, %p109
      %p111 = scmp.le.s32.totalorder 1, %s11
      %p112 = scmp.lt.s32.totalorder %s11, 3
      %p113 = pnand %p111, %p112
      %p114 = pneg %p113
      // Predicated region
      $region9: #{tpu_custom_call.1} parent=5 // pred_check
        _
      $region10: #{tpu_custom_call.1} parent=5 // pred_check_branch
        %116 = sbr.rel (%p113) target = $region12
      $region11: #{tpu_custom_call.1} parent=5 // pred_region
        %s117 = ssub.s32 %s11, 1
        // Predicated region
        $region13: #{tpu_custom_call.1} parent=11 // pred_check
          %p118 = pneg %p75
        $region14: #{tpu_custom_call.1} parent=11 // pred_check_branch
          %120 = sbr.rel (%p118) target = $region16
        $region15: #{tpu_custom_call.1} parent=11 // pred_region
          %p121 = scmp.lt.s32.totalorder %s21, 0
          %s122 = scalar_select %p121, %s21, 0
          %s123 = smul.addr %s122, 4
          %s124 = scalar_lea.vmem %s1, %s123
        $region16: #{tpu_custom_call.1} parent=11 // pred_fallthru
          _
      $region12: #{tpu_custom_call.1} parent=5 // pred_fallthru
        _
      %p125 = scmp.lt.s32.totalorder %s11, 2
      // Predicated region
      $region17: #{tpu_custom_call.1} parent=5 // pred_check
        %p126 = pneg %p125
      $region18: #{tpu_custom_call.1} parent=5 // pred_check_branch
        %128 = sbr.rel (%p126) target = $region20
      $region19: #{tpu_custom_call.1} parent=5 // pred_region
        // Predicated region
        $region21: #{tpu_custom_call.1} parent=19 // pred_check
          %p129 = pneg %p43
        $region22: #{tpu_custom_call.1} parent=19 // pred_check_branch
          %131 = sbr.rel (%p129) target = $region24
        $region23: #{tpu_custom_call.1} parent=19 // pred_region
          %p132 = scmp.lt.s32.totalorder %s18, 1
          %s133 = scalar_select %p132, %s18, 1
          %s134 = smul.addr %s133, 54
          %s135 = smul.addr %s134, 8
          %s136 = scalar_lea.vmem %s0, %s135
        $region24: #{tpu_custom_call.1} parent=19 // pred_fallthru
          _
      $region20: #{tpu_custom_call.1} parent=5 // pred_fallthru
        _
      %p137 = scmp.le.s32.totalorder 1, %s11
      %p138 = scmp.lt.s32.totalorder %s11, 3
      %p139 = pnand %p137, %p138
      %p140 = pneg %p139
      // Predicated region
      $region25: #{tpu_custom_call.1} parent=5 // pred_check
        _
      $region26: #{tpu_custom_call.1} parent=5 // pred_check_branch
        %142 = sbr.rel (%p139) target = $region28
      $region27: #{tpu_custom_call.1} parent=5 // pred_region
        %s143 = ssub.s32 %s11, 1
        %p144 = scmp.lt.s32.totalorder %s20, 1
        %s145 = scalar_select %p144, %s20, 1
        %s146 = smul.addr %s145, 54
        %s147 = smul.addr %s146, 8
        %s148 = scalar_lea.vmem %s0, %s147
        %p149 = pneg %p49
        %p150 = pneg %p46
        %p151 = scmp.lt.s32.totalorder %s21, 0
        %s152 = scalar_select %p151, %s21, 0
        %s153 = smul.addr %s152, 4
        %s154 = scalar_lea.vmem %s1, %s153
        %p155 = pneg %p75
        %p156 = pneg %p72
        %p157 = pneg %p103
        %p158 = pneg %p100
        %s159 = sand.u32 %s90, 1
        %s160 = scalar_lea.sflag [#allocation4], %s159
        %s161 = sand.u32 %s90, 1
        %s162 = smul.addr %s161, 256
        %s163 = scalar_lea.vmem [#allocation3], %s162
        %p164 = scmp.lt.s32.totalorder %s20, 1
        %s165 = scalar_select %p164, %s20, 1
        %s166 = smul.addr %s165, 54
        %s167 = smul.addr %s166, 8
        %s168 = scalar_lea.vmem %s0, %s167
        %p169 = scmp.lt.s32.totalorder %s21, 0
        %s170 = scalar_select %p169, %s21, 0
        %s171 = smul.addr %s170, 4
        %s172 = scalar_lea.vmem %s1, %s171
        %p174 = scmp.eq.s32.totalorder %s21, 0
        // Predicated region
        $region29: #{tpu_custom_call.1} parent=27 // pred_check
          %p175 = pneg %p174
        $region30: #{tpu_custom_call.1} parent=27 // pred_check_branch
          %177 = sbr.rel (%p175) target = $region32
        $region31: #{tpu_custom_call.1} parent=27 // pred_region
          %vm178 = vcmask 1043744
          %179 = vst.msk [vmem:[#allocation2] sm:$0xf] %vm178, 0
          %180 = vst.msk [vmem:[#allocation2 + $0x4] sm:$0xf] %vm178, 0
          %181 = vst.msk [vmem:[#allocation2 + $0x8] sm:$0xf] %vm178, 0
          %182 = vst.msk [vmem:[#allocation2 + $0xc] sm:$0xf] %vm178, 0
          %183 = vst.msk [vmem:[#allocation2 + $0x10] sm:$0xf] %vm178, 0
          %184 = vst.msk [vmem:[#allocation2 + $0x14] sm:$0xf] %vm178, 0
          %185 = vst.msk [vmem:[#allocation2 + $0x18] sm:$0xf] %vm178, 0
          %186 = vst.msk [vmem:[#allocation2 + $0x1c] sm:$0xf] %vm178, 0
          %187 = vst.msk [vmem:[#allocation2 + $0x20] sm:$0xf] %vm178, 0
          %188 = vst.msk [vmem:[#allocation2 + $0x24] sm:$0xf] %vm178, 0
          %189 = vst.msk [vmem:[#allocation2 + $0x28] sm:$0xf] %vm178, 0
          %190 = vst.msk [vmem:[#allocation2 + $0x2c] sm:$0xf] %vm178, 0
          %191 = vst.msk [vmem:[#allocation2 + $0x30] sm:$0xf] %vm178, 0
          %192 = vst.msk [vmem:[#allocation2 + $0x34] sm:$0xf] %vm178, 0
          %193 = vst.msk [vmem:[#allocation2 + $0x38] sm:$0xf] %vm178, 0
          %194 = vst.msk [vmem:[#allocation2 + $0x3c] sm:$0xf] %vm178, 0
          %195 = vst.msk [vmem:[#allocation2 + $0x40] sm:$0xf] %vm178, 0
          %196 = vst.msk [vmem:[#allocation2 + $0x44] sm:$0xf] %vm178, 0
          %197 = vst.msk [vmem:[#allocation2 + $0x48] sm:$0xf] %vm178, 0
          %198 = vst.msk [vmem:[#allocation2 + $0x4c] sm:$0xf] %vm178, 0
          %199 = vst.msk [vmem:[#allocation2 + $0x50] sm:$0xf] %vm178, 0
          %200 = vst.msk [vmem:[#allocation2 + $0x54] sm:$0xf] %vm178, 0
          %201 = vst.msk [vmem:[#allocation2 + $0x58] sm:$0xf] %vm178, 0
          %202 = vst.msk [vmem:[#allocation2 + $0x5c] sm:$0xf] %vm178, 0
          %203 = vst.msk [vmem:[#allocation2 + $0x60] sm:$0xf] %vm178, 0
          %204 = vst.msk [vmem:[#allocation2 + $0x64] sm:$0xf] %vm178, 0
          %205 = vst.msk [vmem:[#allocation2 + $0x68] sm:$0xf] %vm178, 0
          %206 = vst.msk [vmem:[#allocation2 + $0x6c] sm:$0xf] %vm178, 0
          %207 = vst.msk [vmem:[#allocation2 + $0x70] sm:$0xf] %vm178, 0
          %208 = vst.msk [vmem:[#allocation2 + $0x74] sm:$0xf] %vm178, 0
          %209 = vst.msk [vmem:[#allocation2 + $0x78] sm:$0xf] %vm178, 0
          %210 = vst.msk [vmem:[#allocation2 + $0x7c] sm:$0xf] %vm178, 0
          %v211 = vld [vmem:[%s168] sm:$0xff]
          %v212 = vld [vmem:[%s168 + $0x8] sm:$0xff]
          %v213 = vld [vmem:[%s168 + $0x18] sm:$0xff]
          %v214 = vld [vmem:[%s168 + $0x20] sm:$0xff]
          %v215 = vld [vmem:[%s168 + $0x30] sm:$0xff]
          %v216 = vld [vmem:[%s168 + $0x38] sm:$0xff]
          %v217 = vld [vmem:[%s168 + $0x48] sm:$0xff]
          %v218 = vld [vmem:[%s168 + $0x50] sm:$0xff]
          %v219 = vld [vmem:[%s168 + $0x60] sm:$0xff]
          %v220 = vld [vmem:[%s168 + $0x68] sm:$0xff]
          %v221 = vld [vmem:[%s168 + $0x78] sm:$0xff]
          %v222 = vld [vmem:[%s168 + $0x80] sm:$0xff]
          %v223 = vld [vmem:[%s168 + $0x90] sm:$0xff]
          %v224 = vld [vmem:[%s168 + $0x98] sm:$0xff]
          %v225 = vld [vmem:[%s168 + $0xa8] sm:$0xff]
          %v226 = vld [vmem:[%s168 + $0xb0] sm:$0xff]
          %v227 = vld [vmem:[%s168 + $0xc0] sm:$0xff]
          %v228 = vld [vmem:[%s168 + $0xc8] sm:$0xff]
          %v229 = vld [vmem:[%s168 + $0xd8] sm:$0xff]
          %v230 = vld [vmem:[%s168 + $0xe0] sm:$0xff]
          %v231 = vld [vmem:[%s168 + $0xf0] sm:$0xff]
          %v232 = vld [vmem:[%s168 + $0xf8] sm:$0xff]
          %v233 = vld [vmem:[%s168 + $0x108] sm:$0xff]
          %v234 = vld [vmem:[%s168 + $0x110] sm:$0xff]
          %v235 = vld [vmem:[%s168 + $0x120] sm:$0xff]
          %v236 = vld [vmem:[%s168 + $0x128] sm:$0xff]
          %v237 = vld [vmem:[%s168 + $0x138] sm:$0xff]
          %v238 = vld [vmem:[%s168 + $0x140] sm:$0xff]
          %v239 = vld [vmem:[%s168 + $0x150] sm:$0xff]
          %v240 = vld [vmem:[%s168 + $0x158] sm:$0xff]
          %v241 = vld [vmem:[%s168 + $0x168] sm:$0xff]
          %v242 = vld [vmem:[%s168 + $0x170] sm:$0xff]
          %v243 = vpack.c.bf16 %v212, %v211
          %v244 = vpack.c.bf16 %v214, %v213
          %v245 = vpack.c.bf16 %v216, %v215
          %v246 = vpack.c.bf16 %v218, %v217
          %v247 = vpack.c.bf16 %v220, %v219
          %v248 = vpack.c.bf16 %v222, %v221
          %v249 = vpack.c.bf16 %v224, %v223
          %v250 = vpack.c.bf16 %v226, %v225
          %v251 = vpack.c.bf16 %v228, %v227
          %v252 = vpack.c.bf16 %v230, %v229
          %v253 = vpack.c.bf16 %v232, %v231
          %v254 = vpack.c.bf16 %v234, %v233
          %v255 = vpack.c.bf16 %v236, %v235
          %v256 = vpack.c.bf16 %v238, %v237
          %v257 = vpack.c.bf16 %v240, %v239
          %v258 = vpack.c.bf16 %v242, %v241
          %v275 = vunpack.c.l.b16 %v243
          %v276 = vunpack.c.h.b16 %v243
          %v277 = vunpack.c.l.b16 %v244
          %v278 = vunpack.c.h.b16 %v244
          %v279 = vunpack.c.l.b16 %v245
          %v280 = vunpack.c.h.b16 %v245
          %v281 = vunpack.c.l.b16 %v246
          %v282 = vunpack.c.h.b16 %v246
          %v283 = vunpack.c.l.b16 %v247
          %v284 = vunpack.c.h.b16 %v247
          %v285 = vunpack.c.l.b16 %v248
          %v286 = vunpack.c.h.b16 %v248
          %v287 = vunpack.c.l.b16 %v249
          %v288 = vunpack.c.h.b16 %v249
          %v289 = vunpack.c.l.b16 %v250
          %v290 = vunpack.c.h.b16 %v250
          %v291 = vunpack.c.l.b16 %v251
          %v292 = vunpack.c.h.b16 %v251
          %v293 = vunpack.c.l.b16 %v252
          %v294 = vunpack.c.h.b16 %v252
          %v295 = vunpack.c.l.b16 %v253
          %v296 = vunpack.c.h.b16 %v253
          %v297 = vunpack.c.l.b16 %v254
          %v298 = vunpack.c.h.b16 %v254
          %v299 = vunpack.c.l.b16 %v255
          %v300 = vunpack.c.h.b16 %v255
          %v301 = vunpack.c.l.b16 %v256
          %v302 = vunpack.c.h.b16 %v256
          %v303 = vunpack.c.l.b16 %v257
          %v304 = vunpack.c.h.b16 %v257
          %v305 = vunpack.c.l.b16 %v258
          %v306 = vunpack.c.h.b16 %v258
          %v307 = vpack.c.b16 %v275, %v275
          %v308 = vpack.c.b16 %v276, %v276
          %v309 = vpack.c.b16 %v277, %v277
          %v310 = vpack.c.b16 %v278, %v278
          %v311 = vpack.c.b16 %v279, %v279
          %v312 = vpack.c.b16 %v280, %v280
          %v313 = vpack.c.b16 %v281, %v281
          %v314 = vpack.c.b16 %v282, %v282
          %v315 = vpack.c.b16 %v283, %v283
          %v316 = vpack.c.b16 %v284, %v284
          %v317 = vpack.c.b16 %v285, %v285
          %v318 = vpack.c.b16 %v286, %v286
          %v319 = vpack.c.b16 %v287, %v287
          %v320 = vpack.c.b16 %v288, %v288
          %v321 = vpack.c.b16 %v289, %v289
          %v322 = vpack.c.b16 %v290, %v290
          %v323 = vpack.c.b16 %v291, %v291
          %v324 = vpack.c.b16 %v292, %v292
          %v325 = vpack.c.b16 %v293, %v293
          %v326 = vpack.c.b16 %v294, %v294
          %v327 = vpack.c.b16 %v295, %v295
          %v328 = vpack.c.b16 %v296, %v296
          %v329 = vpack.c.b16 %v297, %v297
          %v330 = vpack.c.b16 %v298, %v298
          %v331 = vpack.c.b16 %v299, %v299
          %v332 = vpack.c.b16 %v300, %v300
          %v333 = vpack.c.b16 %v301, %v301
          %v334 = vpack.c.b16 %v302, %v302
          %v335 = vpack.c.b16 %v303, %v303
          %v336 = vpack.c.b16 %v304, %v304
          %v337 = vpack.c.b16 %v305, %v305
          %v338 = vpack.c.b16 %v306, %v306
          %vm371 = vcmask 27648
          %372 = vst.msk [vmem:[#allocation2] sm:$0xf] %vm371, %v307
          %373 = vst.msk [vmem:[#allocation2 + $0x4] sm:$0xf] %vm371, %v308
          %374 = vst.msk [vmem:[#allocation2 + $0x8] sm:$0xf] %vm371, %v309
          %375 = vst.msk [vmem:[#allocation2 + $0xc] sm:$0xf] %vm371, %v310
          %376 = vst.msk [vmem:[#allocation2 + $0x10] sm:$0xf] %vm371, %v311
          %377 = vst.msk [vmem:[#allocation2 + $0x14] sm:$0xf] %vm371, %v312
          %378 = vst.msk [vmem:[#allocation2 + $0x18] sm:$0xf] %vm371, %v313
          %379 = vst.msk [vmem:[#allocation2 + $0x1c] sm:$0xf] %vm371, %v314
          %380 = vst.msk [vmem:[#allocation2 + $0x20] sm:$0xf] %vm371, %v315
          %381 = vst.msk [vmem:[#allocation2 + $0x24] sm:$0xf] %vm371, %v316
          %382 = vst.msk [vmem:[#allocation2 + $0x28] sm:$0xf] %vm371, %v317
          %383 = vst.msk [vmem:[#allocation2 + $0x2c] sm:$0xf] %vm371, %v318
          %384 = vst.msk [vmem:[#allocation2 + $0x30] sm:$0xf] %vm371, %v319
          %385 = vst.msk [vmem:[#allocation2 + $0x34] sm:$0xf] %vm371, %v320
          %386 = vst.msk [vmem:[#allocation2 + $0x38] sm:$0xf] %vm371, %v321
          %387 = vst.msk [vmem:[#allocation2 + $0x3c] sm:$0xf] %vm371, %v322
          %388 = vst.msk [vmem:[#allocation2 + $0x40] sm:$0xf] %vm371, %v323
          %389 = vst.msk [vmem:[#allocation2 + $0x44] sm:$0xf] %vm371, %v324
          %390 = vst.msk [vmem:[#allocation2 + $0x48] sm:$0xf] %vm371, %v325
          %391 = vst.msk [vmem:[#allocation2 + $0x4c] sm:$0xf] %vm371, %v326
          %392 = vst.msk [vmem:[#allocation2 + $0x50] sm:$0xf] %vm371, %v327
          %393 = vst.msk [vmem:[#allocation2 + $0x54] sm:$0xf] %vm371, %v328
          %394 = vst.msk [vmem:[#allocation2 + $0x58] sm:$0xf] %vm371, %v329
          %395 = vst.msk [vmem:[#allocation2 + $0x5c] sm:$0xf] %vm371, %v330
          %396 = vst.msk [vmem:[#allocation2 + $0x60] sm:$0xf] %vm371, %v331
          %397 = vst.msk [vmem:[#allocation2 + $0x64] sm:$0xf] %vm371, %v332
          %398 = vst.msk [vmem:[#allocation2 + $0x68] sm:$0xf] %vm371, %v333
          %399 = vst.msk [vmem:[#allocation2 + $0x6c] sm:$0xf] %vm371, %v334
          %400 = vst.msk [vmem:[#allocation2 + $0x70] sm:$0xf] %vm371, %v335
          %401 = vst.msk [vmem:[#allocation2 + $0x74] sm:$0xf] %vm371, %v336
          %402 = vst.msk [vmem:[#allocation2 + $0x78] sm:$0xf] %vm371, %v337
          %403 = vst.msk [vmem:[#allocation2 + $0x7c] sm:$0xf] %vm371, %v338
          %v404 = vld [vmem:[%s168 + $0x1] sm:$0xff]
          %v405 = vld [vmem:[%s168 + $0x9] sm:$0xff]
          %v406 = vld [vmem:[%s168 + $0x19] sm:$0xff]
          %v407 = vld [vmem:[%s168 + $0x21] sm:$0xff]
          %v408 = vld [vmem:[%s168 + $0x31] sm:$0xff]
          %v409 = vld [vmem:[%s168 + $0x39] sm:$0xff]
          %v410 = vld [vmem:[%s168 + $0x49] sm:$0xff]
          %v411 = vld [vmem:[%s168 + $0x51] sm:$0xff]
          %v412 = vld [vmem:[%s168 + $0x61] sm:$0xff]
          %v413 = vld [vmem:[%s168 + $0x69] sm:$0xff]
          %v414 = vld [vmem:[%s168 + $0x79] sm:$0xff]
          %v415 = vld [vmem:[%s168 + $0x81] sm:$0xff]
          %v416 = vld [vmem:[%s168 + $0x91] sm:$0xff]
          %v417 = vld [vmem:[%s168 + $0x99] sm:$0xff]
          %v418 = vld [vmem:[%s168 + $0xa9] sm:$0xff]
          %v419 = vld [vmem:[%s168 + $0xb1] sm:$0xff]
          %v420 = vld [vmem:[%s168 + $0xc1] sm:$0xff]
          %v421 = vld [vmem:[%s168 + $0xc9] sm:$0xff]
          %v422 = vld [vmem:[%s168 + $0xd9] sm:$0xff]
          %v423 = vld [vmem:[%s168 + $0xe1] sm:$0xff]
          %v424 = vld [vmem:[%s168 + $0xf1] sm:$0xff]
          %v425 = vld [vmem:[%s168 + $0xf9] sm:$0xff]
          %v426 = vld [vmem:[%s168 + $0x109] sm:$0xff]
          %v427 = vld [vmem:[%s168 + $0x111] sm:$0xff]
          %v428 = vld [vmem:[%s168 + $0x121] sm:$0xff]
          %v429 = vld [vmem:[%s168 + $0x129] sm:$0xff]
          %v430 = vld [vmem:[%s168 + $0x139] sm:$0xff]
          %v431 = vld [vmem:[%s168 + $0x141] sm:$0xff]
          %v432 = vld [vmem:[%s168 + $0x151] sm:$0xff]
          %v433 = vld [vmem:[%s168 + $0x159] sm:$0xff]
          %v434 = vld [vmem:[%s168 + $0x169] sm:$0xff]
          %v435 = vld [vmem:[%s168 + $0x171] sm:$0xff]
          %v436 = vpack.c.bf16 %v405, %v404
          %v437 = vpack.c.bf16 %v407, %v406
          %v438 = vpack.c.bf16 %v409, %v408
          %v439 = vpack.c.bf16 %v411, %v410
          %v440 = vpack.c.bf16 %v413, %v412
          %v441 = vpack.c.bf16 %v415, %v414
          %v442 = vpack.c.bf16 %v417, %v416
          %v443 = vpack.c.bf16 %v419, %v418
          %v444 = vpack.c.bf16 %v421, %v420
          %v445 = vpack.c.bf16 %v423, %v422
          %v446 = vpack.c.bf16 %v425, %v424
          %v447 = vpack.c.bf16 %v427, %v426
          %v448 = vpack.c.bf16 %v429, %v428
          %v449 = vpack.c.bf16 %v431, %v430
          %v450 = vpack.c.bf16 %v433, %v432
          %v451 = vpack.c.bf16 %v435, %v434
          %v468 = vunpack.c.l.b16 %v436
          %v469 = vunpack.c.h.b16 %v436
          %v470 = vunpack.c.l.b16 %v437
          %v471 = vunpack.c.h.b16 %v437
          %v472 = vunpack.c.l.b16 %v438
          %v473 = vunpack.c.h.b16 %v438
          %v474 = vunpack.c.l.b16 %v439
          %v475 = vunpack.c.h.b16 %v439
          %v476 = vunpack.c.l.b16 %v440
          %v477 = vunpack.c.h.b16 %v440
          %v478 = vunpack.c.l.b16 %v441
          %v479 = vunpack.c.h.b16 %v441
          %v480 = vunpack.c.l.b16 %v442
          %v481 = vunpack.c.h.b16 %v442
          %v482 = vunpack.c.l.b16 %v443
          %v483 = vunpack.c.h.b16 %v443
          %v484 = vunpack.c.l.b16 %v444
          %v485 = vunpack.c.h.b16 %v444
          %v486 = vunpack.c.l.b16 %v445
          %v487 = vunpack.c.h.b16 %v445
          %v488 = vunpack.c.l.b16 %v446
          %v489 = vunpack.c.h.b16 %v446
          %v490 = vunpack.c.l.b16 %v447
          %v491 = vunpack.c.h.b16 %v447
          %v492 = vunpack.c.l.b16 %v448
          %v493 = vunpack.c.h.b16 %v448
          %v494 = vunpack.c.l.b16 %v449
          %v495 = vunpack.c.h.b16 %v449
          %v496 = vunpack.c.l.b16 %v450
          %v497 = vunpack.c.h.b16 %v450
          %v498 = vunpack.c.l.b16 %v451
          %v499 = vunpack.c.h.b16 %v451
          %v500 = vpack.c.b16 %v468, %v468
          %v501 = vpack.c.b16 %v469, %v469
          %v502 = vpack.c.b16 %v470, %v470
          %v503 = vpack.c.b16 %v471, %v471
          %v504 = vpack.c.b16 %v472, %v472
          %v505 = vpack.c.b16 %v473, %v473
          %v506 = vpack.c.b16 %v474, %v474
          %v507 = vpack.c.b16 %v475, %v475
          %v508 = vpack.c.b16 %v476, %v476
          %v509 = vpack.c.b16 %v477, %v477
          %v510 = vpack.c.b16 %v478, %v478
          %v511 = vpack.c.b16 %v479, %v479
          %v512 = vpack.c.b16 %v480, %v480
          %v513 = vpack.c.b16 %v481, %v481
          %v514 = vpack.c.b16 %v482, %v482
          %v515 = vpack.c.b16 %v483, %v483
          %v516 = vpack.c.b16 %v484, %v484
          %v517 = vpack.c.b16 %v485, %v485
          %v518 = vpack.c.b16 %v486, %v486
          %v519 = vpack.c.b16 %v487, %v487
          %v520 = vpack.c.b16 %v488, %v488
          %v521 = vpack.c.b16 %v489, %v489
          %v522 = vpack.c.b16 %v490, %v490
          %v523 = vpack.c.b16 %v491, %v491
          %v524 = vpack.c.b16 %v492, %v492
          %v525 = vpack.c.b16 %v493, %v493
          %v526 = vpack.c.b16 %v494, %v494
          %v527 = vpack.c.b16 %v495, %v495
          %v528 = vpack.c.b16 %v496, %v496
          %v529 = vpack.c.b16 %v497, %v497
          %v530 = vpack.c.b16 %v498, %v498
          %v531 = vpack.c.b16 %v499, %v499
          %532 = vrot.lane.b32.xlu0 %v500, 4
          %v533 = vpop.permute.xlu0 %532
          %534 = vrot.lane.b32.xlu0 %v501, 4
          %v535 = vpop.permute.xlu0 %534
          %536 = vrot.lane.b32.xlu0 %v502, 4
          %v537 = vpop.permute.xlu0 %536
          %538 = vrot.lane.b32.xlu0 %v503, 4
          %v539 = vpop.permute.xlu0 %538
          %540 = vrot.lane.b32.xlu0 %v504, 4
          %v541 = vpop.permute.xlu0 %540
          %542 = vrot.lane.b32.xlu0 %v505, 4
          %v543 = vpop.permute.xlu0 %542
          %544 = vrot.lane.b32.xlu0 %v506, 4
          %v545 = vpop.permute.xlu0 %544
          %546 = vrot.lane.b32.xlu0 %v507, 4
          %v547 = vpop.permute.xlu0 %546
          %548 = vrot.lane.b32.xlu0 %v508, 4
          %v549 = vpop.permute.xlu0 %548
          %550 = vrot.lane.b32.xlu0 %v509, 4
          %v551 = vpop.permute.xlu0 %550
          %552 = vrot.lane.b32.xlu0 %v510, 4
          %v553 = vpop.permute.xlu0 %552
          %554 = vrot.lane.b32.xlu0 %v511, 4
          %v555 = vpop.permute.xlu0 %554
          %556 = vrot.lane.b32.xlu0 %v512, 4
          %v557 = vpop.permute.xlu0 %556
          %558 = vrot.lane.b32.xlu0 %v513, 4
          %v559 = vpop.permute.xlu0 %558
          %560 = vrot.lane.b32.xlu0 %v514, 4
          %v561 = vpop.permute.xlu0 %560
          %562 = vrot.lane.b32.xlu0 %v515, 4
          %v563 = vpop.permute.xlu0 %562
          %564 = vrot.lane.b32.xlu0 %v516, 4
          %v565 = vpop.permute.xlu0 %564
          %566 = vrot.lane.b32.xlu0 %v517, 4
          %v567 = vpop.permute.xlu0 %566
          %568 = vrot.lane.b32.xlu0 %v518, 4
          %v569 = vpop.permute.xlu0 %568
          %570 = vrot.lane.b32.xlu0 %v519, 4
          %v571 = vpop.permute.xlu0 %570
          %572 = vrot.lane.b32.xlu0 %v520, 4
          %v573 = vpop.permute.xlu0 %572
          %574 = vrot.lane.b32.xlu0 %v521, 4
          %v575 = vpop.permute.xlu0 %574
          %576 = vrot.lane.b32.xlu0 %v522, 4
          %v577 = vpop.permute.xlu0 %576
          %578 = vrot.lane.b32.xlu0 %v523, 4
          %v579 = vpop.permute.xlu0 %578
          %580 = vrot.lane.b32.xlu0 %v524, 4
          %v581 = vpop.permute.xlu0 %580
          %582 = vrot.lane.b32.xlu0 %v525, 4
          %v583 = vpop.permute.xlu0 %582
          %584 = vrot.lane.b32.xlu0 %v526, 4
          %v585 = vpop.permute.xlu0 %584
          %586 = vrot.lane.b32.xlu0 %v527, 4
          %v587 = vpop.permute.xlu0 %586
          %588 = vrot.lane.b32.xlu0 %v528, 4
          %v589 = vpop.permute.xlu0 %588
          %590 = vrot.lane.b32.xlu0 %v529, 4
          %v591 = vpop.permute.xlu0 %590
          %592 = vrot.lane.b32.xlu0 %v530, 4
          %v593 = vpop.permute.xlu0 %592
          %594 = vrot.lane.b32.xlu0 %v531, 4
          %v595 = vpop.permute.xlu0 %594
          %vm628 = vcmask 60448
          %629 = vst.msk [vmem:[#allocation2] sm:$0xf] %vm628, %v533
          %630 = vst.msk [vmem:[#allocation2 + $0x4] sm:$0xf] %vm628, %v535
          %631 = vst.msk [vmem:[#allocation2 + $0x8] sm:$0xf] %vm628, %v537
          %632 = vst.msk [vmem:[#allocation2 + $0xc] sm:$0xf] %vm628, %v539
          %633 = vst.msk [vmem:[#allocation2 + $0x10] sm:$0xf] %vm628, %v541
          %634 = vst.msk [vmem:[#allocation2 + $0x14] sm:$0xf] %vm628, %v543
          %635 = vst.msk [vmem:[#allocation2 + $0x18] sm:$0xf] %vm628, %v545
          %636 = vst.msk [vmem:[#allocation2 + $0x1c] sm:$0xf] %vm628, %v547
          %637 = vst.msk [vmem:[#allocation2 + $0x20] sm:$0xf] %vm628, %v549
          %638 = vst.msk [vmem:[#allocation2 + $0x24] sm:$0xf] %vm628, %v551
          %639 = vst.msk [vmem:[#allocation2 + $0x28] sm:$0xf] %vm628, %v553
          %640 = vst.msk [vmem:[#allocation2 + $0x2c] sm:$0xf] %vm628, %v555
          %641 = vst.msk [vmem:[#allocation2 + $0x30] sm:$0xf] %vm628, %v557
          %642 = vst.msk [vmem:[#allocation2 + $0x34] sm:$0xf] %vm628, %v559
          %643 = vst.msk [vmem:[#allocation2 + $0x38] sm:$0xf] %vm628, %v561
          %644 = vst.msk [vmem:[#allocation2 + $0x3c] sm:$0xf] %vm628, %v563
          %645 = vst.msk [vmem:[#allocation2 + $0x40] sm:$0xf] %vm628, %v565
          %646 = vst.msk [vmem:[#allocation2 + $0x44] sm:$0xf] %vm628, %v567
          %647 = vst.msk [vmem:[#allocation2 + $0x48] sm:$0xf] %vm628, %v569
          %648 = vst.msk [vmem:[#allocation2 + $0x4c] sm:$0xf] %vm628, %v571
          %649 = vst.msk [vmem:[#allocation2 + $0x50] sm:$0xf] %vm628, %v573
          %650 = vst.msk [vmem:[#allocation2 + $0x54] sm:$0xf] %vm628, %v575
          %651 = vst.msk [vmem:[#allocation2 + $0x58] sm:$0xf] %vm628, %v577
          %652 = vst.msk [vmem:[#allocation2 + $0x5c] sm:$0xf] %vm628, %v579
          %653 = vst.msk [vmem:[#allocation2 + $0x60] sm:$0xf] %vm628, %v581
          %654 = vst.msk [vmem:[#allocation2 + $0x64] sm:$0xf] %vm628, %v583
          %655 = vst.msk [vmem:[#allocation2 + $0x68] sm:$0xf] %vm628, %v585
          %656 = vst.msk [vmem:[#allocation2 + $0x6c] sm:$0xf] %vm628, %v587
          %657 = vst.msk [vmem:[#allocation2 + $0x70] sm:$0xf] %vm628, %v589
          %658 = vst.msk [vmem:[#allocation2 + $0x74] sm:$0xf] %vm628, %v591
          %659 = vst.msk [vmem:[#allocation2 + $0x78] sm:$0xf] %vm628, %v593
          %660 = vst.msk [vmem:[#allocation2 + $0x7c] sm:$0xf] %vm628, %v595
          %v661 = vld [vmem:[%s168 + $0x2] sm:$0xff]
          %v662 = vld [vmem:[%s168 + $0xa] sm:$0xff]
          %v663 = vld [vmem:[%s168 + $0x1a] sm:$0xff]
          %v664 = vld [vmem:[%s168 + $0x22] sm:$0xff]
          %v665 = vld [vmem:[%s168 + $0x32] sm:$0xff]
          %v666 = vld [vmem:[%s168 + $0x3a] sm:$0xff]
          %v667 = vld [vmem:[%s168 + $0x4a] sm:$0xff]
          %v668 = vld [vmem:[%s168 + $0x52] sm:$0xff]
          %v669 = vld [vmem:[%s168 + $0x62] sm:$0xff]
          %v670 = vld [vmem:[%s168 + $0x6a] sm:$0xff]
          %v671 = vld [vmem:[%s168 + $0x7a] sm:$0xff]
          %v672 = vld [vmem:[%s168 + $0x82] sm:$0xff]
          %v673 = vld [vmem:[%s168 + $0x92] sm:$0xff]
          %v674 = vld [vmem:[%s168 + $0x9a] sm:$0xff]
          %v675 = vld [vmem:[%s168 + $0xaa] sm:$0xff]
          %v676 = vld [vmem:[%s168 + $0xb2] sm:$0xff]
          %v677 = vld [vmem:[%s168 + $0xc2] sm:$0xff]
          %v678 = vld [vmem:[%s168 + $0xca] sm:$0xff]
          %v679 = vld [vmem:[%s168 + $0xda] sm:$0xff]
          %v680 = vld [vmem:[%s168 + $0xe2] sm:$0xff]
          %v681 = vld [vmem:[%s168 + $0xf2] sm:$0xff]
          %v682 = vld [vmem:[%s168 + $0xfa] sm:$0xff]
          %v683 = vld [vmem:[%s168 + $0x10a] sm:$0xff]
          %v684 = vld [vmem:[%s168 + $0x112] sm:$0xff]
          %v685 = vld [vmem:[%s168 + $0x122] sm:$0xff]
          %v686 = vld [vmem:[%s168 + $0x12a] sm:$0xff]
          %v687 = vld [vmem:[%s168 + $0x13a] sm:$0xff]
          %v688 = vld [vmem:[%s168 + $0x142] sm:$0xff]
          %v689 = vld [vmem:[%s168 + $0x152] sm:$0xff]
          %v690 = vld [vmem:[%s168 + $0x15a] sm:$0xff]
          %v691 = vld [vmem:[%s168 + $0x16a] sm:$0xff]
          %v692 = vld [vmem:[%s168 + $0x172] sm:$0xff]
          %v693 = vpack.c.bf16 %v662, %v661
          %v694 = vpack.c.bf16 %v664, %v663
          %v695 = vpack.c.bf16 %v666, %v665
          %v696 = vpack.c.bf16 %v668, %v667
          %v697 = vpack.c.bf16 %v670, %v669
          %v698 = vpack.c.bf16 %v672, %v671
          %v699 = vpack.c.bf16 %v674, %v673
          %v700 = vpack.c.bf16 %v676, %v675
          %v701 = vpack.c.bf16 %v678, %v677
          %v702 = vpack.c.bf16 %v680, %v679
          %v703 = vpack.c.bf16 %v682, %v681
          %v704 = vpack.c.bf16 %v684, %v683
          %v705 = vpack.c.bf16 %v686, %v685
          %v706 = vpack.c.bf16 %v688, %v687
          %v707 = vpack.c.bf16 %v690, %v689
          %v708 = vpack.c.bf16 %v692, %v691
          %v725 = vunpack.c.l.b16 %v693
          %v726 = vunpack.c.h.b16 %v693
          %v727 = vunpack.c.l.b16 %v694
          %v728 = vunpack.c.h.b16 %v694
          %v729 = vunpack.c.l.b16 %v695
          %v730 = vunpack.c.h.b16 %v695
          %v731 = vunpack.c.l.b16 %v696
          %v732 = vunpack.c.h.b16 %v696
          %v733 = vunpack.c.l.b16 %v697
          %v734 = vunpack.c.h.b16 %v697
          %v735 = vunpack.c.l.b16 %v698
          %v736 = vunpack.c.h.b16 %v698
          %v737 = vunpack.c.l.b16 %v699
          %v738 = vunpack.c.h.b16 %v699
          %v739 = vunpack.c.l.b16 %v700
          %v740 = vunpack.c.h.b16 %v700
          %v741 = vunpack.c.l.b16 %v701
          %v742 = vunpack.c.h.b16 %v701
          %v743 = vunpack.c.l.b16 %v702
          %v744 = vunpack.c.h.b16 %v702
          %v745 = vunpack.c.l.b16 %v703
          %v746 = vunpack.c.h.b16 %v703
          %v747 = vunpack.c.l.b16 %v704
          %v748 = vunpack.c.h.b16 %v704
          %v749 = vunpack.c.l.b16 %v705
          %v750 = vunpack.c.h.b16 %v705
          %v751 = vunpack.c.l.b16 %v706
          %v752 = vunpack.c.h.b16 %v706
          %v753 = vunpack.c.l.b16 %v707
          %v754 = vunpack.c.h.b16 %v707
          %v755 = vunpack.c.l.b16 %v708
          %v756 = vunpack.c.h.b16 %v708
          %v757 = vpack.c.b16 %v725, %v725
          %v758 = vpack.c.b16 %v726, %v726
          %v759 = vpack.c.b16 %v727, %v727
          %v760 = vpack.c.b16 %v728, %v728
          %v761 = vpack.c.b16 %v729, %v729
          %v762 = vpack.c.b16 %v730, %v730
          %v763 = vpack.c.b16 %v731, %v731
          %v764 = vpack.c.b16 %v732, %v732
          %v765 = vpack.c.b16 %v733, %v733
          %v766 = vpack.c.b16 %v734, %v734
          %v767 = vpack.c.b16 %v735, %v735
          %v768 = vpack.c.b16 %v736, %v736
          %v769 = vpack.c.b16 %v737, %v737
          %v770 = vpack.c.b16 %v738, %v738
          %v771 = vpack.c.b16 %v739, %v739
          %v772 = vpack.c.b16 %v740, %v740
          %v773 = vpack.c.b16 %v741, %v741
          %v774 = vpack.c.b16 %v742, %v742
          %v775 = vpack.c.b16 %v743, %v743
          %v776 = vpack.c.b16 %v744, %v744
          %v777 = vpack.c.b16 %v745, %v745
          %v778 = vpack.c.b16 %v746, %v746
          %v779 = vpack.c.b16 %v747, %v747
          %v780 = vpack.c.b16 %v748, %v748
          %v781 = vpack.c.b16 %v749, %v749
          %v782 = vpack.c.b16 %v750, %v750
          %v783 = vpack.c.b16 %v751, %v751
          %v784 = vpack.c.b16 %v752, %v752
          %v785 = vpack.c.b16 %v753, %v753
          %v786 = vpack.c.b16 %v754, %v754
          %v787 = vpack.c.b16 %v755, %v755
          %v788 = vpack.c.b16 %v756, %v756
          %789 = vrot.lane.b32.xlu0 %v757, 8
          %v790 = vpop.permute.xlu0 %789
          %791 = vrot.lane.b32.xlu0 %v758, 8
          %v792 = vpop.permute.xlu0 %791
          %793 = vrot.lane.b32.xlu0 %v759, 8
          %v794 = vpop.permute.xlu0 %793
          %795 = vrot.lane.b32.xlu0 %v760, 8
          %v796 = vpop.permute.xlu0 %795
          %797 = vrot.lane.b32.xlu0 %v761, 8
          %v798 = vpop.permute.xlu0 %797
          %799 = vrot.lane.b32.xlu0 %v762, 8
          %v800 = vpop.permute.xlu0 %799
          %801 = vrot.lane.b32.xlu0 %v763, 8
          %v802 = vpop.permute.xlu0 %801
          %803 = vrot.lane.b32.xlu0 %v764, 8
          %v804 = vpop.permute.xlu0 %803
          %805 = vrot.lane.b32.xlu0 %v765, 8
          %v806 = vpop.permute.xlu0 %805
          %807 = vrot.lane.b32.xlu0 %v766, 8
          %v808 = vpop.permute.xlu0 %807
          %809 = vrot.lane.b32.xlu0 %v767, 8
          %v810 = vpop.permute.xlu0 %809
          %811 = vrot.lane.b32.xlu0 %v768, 8
          %v812 = vpop.permute.xlu0 %811
          %813 = vrot.lane.b32.xlu0 %v769, 8
          %v814 = vpop.permute.xlu0 %813
          %815 = vrot.lane.b32.xlu0 %v770, 8
          %v816 = vpop.permute.xlu0 %815
          %817 = vrot.lane.b32.xlu0 %v771, 8
          %v818 = vpop.permute.xlu0 %817
          %819 = vrot.lane.b32.xlu0 %v772, 8
          %v820 = vpop.permute.xlu0 %819
          %821 = vrot.lane.b32.xlu0 %v773, 8
          %v822 = vpop.permute.xlu0 %821
          %823 = vrot.lane.b32.xlu0 %v774, 8
          %v824 = vpop.permute.xlu0 %823
          %825 = vrot.lane.b32.xlu0 %v775, 8
          %v826 = vpop.permute.xlu0 %825
          %827 = vrot.lane.b32.xlu0 %v776, 8
          %v828 = vpop.permute.xlu0 %827
          %829 = vrot.lane.b32.xlu0 %v777, 8
          %v830 = vpop.permute.xlu0 %829
          %831 = vrot.lane.b32.xlu0 %v778, 8
          %v832 = vpop.permute.xlu0 %831
          %833 = vrot.lane.b32.xlu0 %v779, 8
          %v834 = vpop.permute.xlu0 %833
          %835 = vrot.lane.b32.xlu0 %v780, 8
          %v836 = vpop.permute.xlu0 %835
          %837 = vrot.lane.b32.xlu0 %v781, 8
          %v838 = vpop.permute.xlu0 %837
          %839 = vrot.lane.b32.xlu0 %v782, 8
          %v840 = vpop.permute.xlu0 %839
          %841 = vrot.lane.b32.xlu0 %v783, 8
          %v842 = vpop.permute.xlu0 %841
          %843 = vrot.lane.b32.xlu0 %v784, 8
          %v844 = vpop.permute.xlu0 %843
          %845 = vrot.lane.b32.xlu0 %v785, 8
          %v846 = vpop.permute.xlu0 %845
          %847 = vrot.lane.b32.xlu0 %v786, 8
          %v848 = vpop.permute.xlu0 %847
          %849 = vrot.lane.b32.xlu0 %v787, 8
          %v850 = vpop.permute.xlu0 %849
          %851 = vrot.lane.b32.xlu0 %v788, 8
          %v852 = vpop.permute.xlu0 %851
          %vm885 = vcmask 93248
          %886 = vst.msk [vmem:[#allocation2] sm:$0xf] %vm885, %v790
          %887 = vst.msk [vmem:[#allocation2 + $0x4] sm:$0xf] %vm885, %v792
          %888 = vst.msk [vmem:[#allocation2 + $0x8] sm:$0xf] %vm885, %v794
          %889 = vst.msk [vmem:[#allocation2 + $0xc] sm:$0xf] %vm885, %v796
          %890 = vst.msk [vmem:[#allocation2 + $0x10] sm:$0xf] %vm885, %v798
          %891 = vst.msk [vmem:[#allocation2 + $0x14] sm:$0xf] %vm885, %v800
          %892 = vst.msk [vmem:[#allocation2 + $0x18] sm:$0xf] %vm885, %v802
          %893 = vst.msk [vmem:[#allocation2 + $0x1c] sm:$0xf] %vm885, %v804
          %894 = vst.msk [vmem:[#allocation2 + $0x20] sm:$0xf] %vm885, %v806
          %895 = vst.msk [vmem:[#allocation2 + $0x24] sm:$0xf] %vm885, %v808
          %896 = vst.msk [vmem:[#allocation2 + $0x28] sm:$0xf] %vm885, %v810
          %897 = vst.msk [vmem:[#allocation2 + $0x2c] sm:$0xf] %vm885, %v812
          %898 = vst.msk [vmem:[#allocation2 + $0x30] sm:$0xf] %vm885, %v814
          %899 = vst.msk [vmem:[#allocation2 + $0x34] sm:$0xf] %vm885, %v816
          %900 = vst.msk [vmem:[#allocation2 + $0x38] sm:$0xf] %vm885, %v818
          %901 = vst.msk [vmem:[#allocation2 + $0x3c] sm:$0xf] %vm885, %v820
          %902 = vst.msk [vmem:[#allocation2 + $0x40] sm:$0xf] %vm885, %v822
          %903 = vst.msk [vmem:[#allocation2 + $0x44] sm:$0xf] %vm885, %v824
          %904 = vst.msk [vmem:[#allocation2 + $0x48] sm:$0xf] %vm885, %v826
          %905 = vst.msk [vmem:[#allocation2 + $0x4c] sm:$0xf] %vm885, %v828
          %906 = vst.msk [vmem:[#allocation2 + $0x50] sm:$0xf] %vm885, %v830
          %907 = vst.msk [vmem:[#allocation2 + $0x54] sm:$0xf] %vm885, %v832
          %908 = vst.msk [vmem:[#allocation2 + $0x58] sm:$0xf] %vm885, %v834
          %909 = vst.msk [vmem:[#allocation2 + $0x5c] sm:$0xf] %vm885, %v836
          %910 = vst.msk [vmem:[#allocation2 + $0x60] sm:$0xf] %vm885, %v838
          %911 = vst.msk [vmem:[#allocation2 + $0x64] sm:$0xf] %vm885, %v840
          %912 = vst.msk [vmem:[#allocation2 + $0x68] sm:$0xf] %vm885, %v842
          %913 = vst.msk [vmem:[#allocation2 + $0x6c] sm:$0xf] %vm885, %v844
          %914 = vst.msk [vmem:[#allocation2 + $0x70] sm:$0xf] %vm885, %v846
          %915 = vst.msk [vmem:[#allocation2 + $0x74] sm:$0xf] %vm885, %v848
          %916 = vst.msk [vmem:[#allocation2 + $0x78] sm:$0xf] %vm885, %v850
          %917 = vst.msk [vmem:[#allocation2 + $0x7c] sm:$0xf] %vm885, %v852
          %s918 = scalar_lea.vmem %s168, 24
          %v919 = vld [vmem:[%s918] sm:$0xff]
          %v920 = vld [vmem:[%s918 + $0x8] sm:$0xff]
          %v921 = vld [vmem:[%s918 + $0x18] sm:$0xff]
          %v922 = vld [vmem:[%s918 + $0x20] sm:$0xff]
          %v923 = vld [vmem:[%s918 + $0x30] sm:$0xff]
          %v924 = vld [vmem:[%s918 + $0x38] sm:$0xff]
          %v925 = vld [vmem:[%s918 + $0x48] sm:$0xff]
          %v926 = vld [vmem:[%s918 + $0x50] sm:$0xff]
          %v927 = vld [vmem:[%s918 + $0x60] sm:$0xff]
          %v928 = vld [vmem:[%s918 + $0x68] sm:$0xff]
          %v929 = vld [vmem:[%s918 + $0x78] sm:$0xff]
          %v930 = vld [vmem:[%s918 + $0x80] sm:$0xff]
          %v931 = vld [vmem:[%s918 + $0x90] sm:$0xff]
          %v932 = vld [vmem:[%s918 + $0x98] sm:$0xff]
          %v933 = vld [vmem:[%s918 + $0xa8] sm:$0xff]
          %v934 = vld [vmem:[%s918 + $0xb0] sm:$0xff]
          %v935 = vld [vmem:[%s918 + $0xc0] sm:$0xff]
          %v936 = vld [vmem:[%s918 + $0xc8] sm:$0xff]
          %v937 = vld [vmem:[%s918 + $0xd8] sm:$0xff]
          %v938 = vld [vmem:[%s918 + $0xe0] sm:$0xff]
          %v939 = vld [vmem:[%s918 + $0xf0] sm:$0xff]
          %v940 = vld [vmem:[%s918 + $0xf8] sm:$0xff]
          %v941 = vld [vmem:[%s918 + $0x108] sm:$0xff]
          %v942 = vld [vmem:[%s918 + $0x110] sm:$0xff]
          %v943 = vld [vmem:[%s918 + $0x120] sm:$0xff]
          %v944 = vld [vmem:[%s918 + $0x128] sm:$0xff]
          %v945 = vld [vmem:[%s918 + $0x138] sm:$0xff]
          %v946 = vld [vmem:[%s918 + $0x140] sm:$0xff]
          %v947 = vld [vmem:[%s918 + $0x150] sm:$0xff]
          %v948 = vld [vmem:[%s918 + $0x158] sm:$0xff]
          %v949 = vld [vmem:[%s918 + $0x168] sm:$0xff]
          %v950 = vld [vmem:[%s918 + $0x170] sm:$0xff]
          %v951 = vpack.c.bf16 %v920, %v919
          %v952 = vpack.c.bf16 %v922, %v921
          %v953 = vpack.c.bf16 %v924, %v923
          %v954 = vpack.c.bf16 %v926, %v925
          %v955 = vpack.c.bf16 %v928, %v927
          %v956 = vpack.c.bf16 %v930, %v929
          %v957 = vpack.c.bf16 %v932, %v931
          %v958 = vpack.c.bf16 %v934, %v933
          %v959 = vpack.c.bf16 %v936, %v935
          %v960 = vpack.c.bf16 %v938, %v937
          %v961 = vpack.c.bf16 %v940, %v939
          %v962 = vpack.c.bf16 %v942, %v941
          %v963 = vpack.c.bf16 %v944, %v943
          %v964 = vpack.c.bf16 %v946, %v945
          %v965 = vpack.c.bf16 %v948, %v947
          %v966 = vpack.c.bf16 %v950, %v949
          %v983 = vunpack.c.l.b16 %v951
          %v984 = vunpack.c.h.b16 %v951
          %v985 = vunpack.c.l.b16 %v952
          %v986 = vunpack.c.h.b16 %v952
          %v987 = vunpack.c.l.b16 %v953
          %v988 = vunpack.c.h.b16 %v953
          %v989 = vunpack.c.l.b16 %v954
          %v990 = vunpack.c.h.b16 %v954
          %v991 = vunpack.c.l.b16 %v955
          %v992 = vunpack.c.h.b16 %v955
          %v993 = vunpack.c.l.b16 %v956
          %v994 = vunpack.c.h.b16 %v956
          %v995 = vunpack.c.l.b16 %v957
          %v996 = vunpack.c.h.b16 %v957
          %v997 = vunpack.c.l.b16 %v958
          %v998 = vunpack.c.h.b16 %v958
          %v999 = vunpack.c.l.b16 %v959
          %v1000 = vunpack.c.h.b16 %v959
          %v1001 = vunpack.c.l.b16 %v960
          %v1002 = vunpack.c.h.b16 %v960
          %v1003 = vunpack.c.l.b16 %v961
          %v1004 = vunpack.c.h.b16 %v961
          %v1005 = vunpack.c.l.b16 %v962
          %v1006 = vunpack.c.h.b16 %v962
          %v1007 = vunpack.c.l.b16 %v963
          %v1008 = vunpack.c.h.b16 %v963
          %v1009 = vunpack.c.l.b16 %v964
          %v1010 = vunpack.c.h.b16 %v964
          %v1011 = vunpack.c.l.b16 %v965
          %v1012 = vunpack.c.h.b16 %v965
          %v1013 = vunpack.c.l.b16 %v966
          %v1014 = vunpack.c.h.b16 %v966
          %v1015 = vpack.c.b16 %v983, %v983
          %v1016 = vpack.c.b16 %v984, %v984
          %v1017 = vpack.c.b16 %v985, %v985
          %v1018 = vpack.c.b16 %v986, %v986
          %v1019 = vpack.c.b16 %v987, %v987
          %v1020 = vpack.c.b16 %v988, %v988
          %v1021 = vpack.c.b16 %v989, %v989
          %v1022 = vpack.c.b16 %v990, %v990
          %v1023 = vpack.c.b16 %v991, %v991
          %v1024 = vpack.c.b16 %v992, %v992
          %v1025 = vpack.c.b16 %v993, %v993
          %v1026 = vpack.c.b16 %v994, %v994
          %v1027 = vpack.c.b16 %v995, %v995
          %v1028 = vpack.c.b16 %v996, %v996
          %v1029 = vpack.c.b16 %v997, %v997
          %v1030 = vpack.c.b16 %v998, %v998
          %v1031 = vpack.c.b16 %v999, %v999
          %v1032 = vpack.c.b16 %v1000, %v1000
          %v1033 = vpack.c.b16 %v1001, %v1001
          %v1034 = vpack.c.b16 %v1002, %v1002
          %v1035 = vpack.c.b16 %v1003, %v1003
          %v1036 = vpack.c.b16 %v1004, %v1004
          %v1037 = vpack.c.b16 %v1005, %v1005
          %v1038 = vpack.c.b16 %v1006, %v1006
          %v1039 = vpack.c.b16 %v1007, %v1007
          %v1040 = vpack.c.b16 %v1008, %v1008
          %v1041 = vpack.c.b16 %v1009, %v1009
          %v1042 = vpack.c.b16 %v1010, %v1010
          %v1043 = vpack.c.b16 %v1011, %v1011
          %v1044 = vpack.c.b16 %v1012, %v1012
          %v1045 = vpack.c.b16 %v1013, %v1013
          %v1046 = vpack.c.b16 %v1014, %v1014
          %1047 = vrot.lane.b32.xlu0 %v1015, 12
          %v1048 = vpop.permute.xlu0 %1047
          %1049 = vrot.lane.b32.xlu0 %v1016, 12
          %v1050 = vpop.permute.xlu0 %1049
          %1051 = vrot.lane.b32.xlu0 %v1017, 12
          %v1052 = vpop.permute.xlu0 %1051
          %1053 = vrot.lane.b32.xlu0 %v1018, 12
          %v1054 = vpop.permute.xlu0 %1053
          %1055 = vrot.lane.b32.xlu0 %v1019, 12
          %v1056 = vpop.permute.xlu0 %1055
          %1057 = vrot.lane.b32.xlu0 %v1020, 12
          %v1058 = vpop.permute.xlu0 %1057
          %1059 = vrot.lane.b32.xlu0 %v1021, 12
          %v1060 = vpop.permute.xlu0 %1059
          %1061 = vrot.lane.b32.xlu0 %v1022, 12
          %v1062 = vpop.permute.xlu0 %1061
          %1063 = vrot.lane.b32.xlu0 %v1023, 12
          %v1064 = vpop.permute.xlu0 %1063
          %1065 = vrot.lane.b32.xlu0 %v1024, 12
          %v1066 = vpop.permute.xlu0 %1065
          %1067 = vrot.lane.b32.xlu0 %v1025, 12
          %v1068 = vpop.permute.xlu0 %1067
          %1069 = vrot.lane.b32.xlu0 %v1026, 12
          %v1070 = vpop.permute.xlu0 %1069
          %1071 = vrot.lane.b32.xlu0 %v1027, 12
          %v1072 = vpop.permute.xlu0 %1071
          %1073 = vrot.lane.b32.xlu0 %v1028, 12
          %v1074 = vpop.permute.xlu0 %1073
          %1075 = vrot.lane.b32.xlu0 %v1029, 12
          %v1076 = vpop.permute.xlu0 %1075
          %1077 = vrot.lane.b32.xlu0 %v1030, 12
          %v1078 = vpop.permute.xlu0 %1077
          %1079 = vrot.lane.b32.xlu0 %v1031, 12
          %v1080 = vpop.permute.xlu0 %1079
          %1081 = vrot.lane.b32.xlu0 %v1032, 12
          %v1082 = vpop.permute.xlu0 %1081
          %1083 = vrot.lane.b32.xlu0 %v1033, 12
          %v1084 = vpop.permute.xlu0 %1083
          %1085 = vrot.lane.b32.xlu0 %v1034, 12
          %v1086 = vpop.permute.xlu0 %1085
          %1087 = vrot.lane.b32.xlu0 %v1035, 12
          %v1088 = vpop.permute.xlu0 %1087
          %1089 = vrot.lane.b32.xlu0 %v1036, 12
          %v1090 = vpop.permute.xlu0 %1089
          %1091 = vrot.lane.b32.xlu0 %v1037, 12
          %v1092 = vpop.permute.xlu0 %1091
          %1093 = vrot.lane.b32.xlu0 %v1038, 12
          %v1094 = vpop.permute.xlu0 %1093
          %1095 = vrot.lane.b32.xlu0 %v1039, 12
          %v1096 = vpop.permute.xlu0 %1095
          %1097 = vrot.lane.b32.xlu0 %v1040, 12
          %v1098 = vpop.permute.xlu0 %1097
          %1099 = vrot.lane.b32.xlu0 %v1041, 12
          %v1100 = vpop.permute.xlu0 %1099
          %1101 = vrot.lane.b32.xlu0 %v1042, 12
          %v1102 = vpop.permute.xlu0 %1101
          %1103 = vrot.lane.b32.xlu0 %v1043, 12
          %v1104 = vpop.permute.xlu0 %1103
          %1105 = vrot.lane.b32.xlu0 %v1044, 12
          %v1106 = vpop.permute.xlu0 %1105
          %1107 = vrot.lane.b32.xlu0 %v1045, 12
          %v1108 = vpop.permute.xlu0 %1107
          %1109 = vrot.lane.b32.xlu0 %v1046, 12
          %v1110 = vpop.permute.xlu0 %1109
          %vm1143 = vcmask 126048
          %1144 = vst.msk [vmem:[#allocation2] sm:$0xf] %vm1143, %v1048
          %1145 = vst.msk [vmem:[#allocation2 + $0x4] sm:$0xf] %vm1143, %v1050
          %1146 = vst.msk [vmem:[#allocation2 + $0x8] sm:$0xf] %vm1143, %v1052
          %1147 = vst.msk [vmem:[#allocation2 + $0xc] sm:$0xf] %vm1143, %v1054
          %1148 = vst.msk [vmem:[#allocation2 + $0x10] sm:$0xf] %vm1143, %v1056
          %1149 = vst.msk [vmem:[#allocation2 + $0x14] sm:$0xf] %vm1143, %v1058
          %1150 = vst.msk [vmem:[#allocation2 + $0x18] sm:$0xf] %vm1143, %v1060
          %1151 = vst.msk [vmem:[#allocation2 + $0x1c] sm:$0xf] %vm1143, %v1062
          %1152 = vst.msk [vmem:[#allocation2 + $0x20] sm:$0xf] %vm1143, %v1064
          %1153 = vst.msk [vmem:[#allocation2 + $0x24] sm:$0xf] %vm1143, %v1066
          %1154 = vst.msk [vmem:[#allocation2 + $0x28] sm:$0xf] %vm1143, %v1068
          %1155 = vst.msk [vmem:[#allocation2 + $0x2c] sm:$0xf] %vm1143, %v1070
          %1156 = vst.msk [vmem:[#allocation2 + $0x30] sm:$0xf] %vm1143, %v1072
          %1157 = vst.msk [vmem:[#allocation2 + $0x34] sm:$0xf] %vm1143, %v1074
          %1158 = vst.msk [vmem:[#allocation2 + $0x38] sm:$0xf] %vm1143, %v1076
          %1159 = vst.msk [vmem:[#allocation2 + $0x3c] sm:$0xf] %vm1143, %v1078
          %1160 = vst.msk [vmem:[#allocation2 + $0x40] sm:$0xf] %vm1143, %v1080
          %1161 = vst.msk [vmem:[#allocation2 + $0x44] sm:$0xf] %vm1143, %v1082
          %1162 = vst.msk [vmem:[#allocation2 + $0x48] sm:$0xf] %vm1143, %v1084
          %1163 = vst.msk [vmem:[#allocation2 + $0x4c] sm:$0xf] %vm1143, %v1086
          %1164 = vst.msk [vmem:[#allocation2 + $0x50] sm:$0xf] %vm1143, %v1088
          %1165 = vst.msk [vmem:[#allocation2 + $0x54] sm:$0xf] %vm1143, %v1090
          %1166 = vst.msk [vmem:[#allocation2 + $0x58] sm:$0xf] %vm1143, %v1092
          %1167 = vst.msk [vmem:[#allocation2 + $0x5c] sm:$0xf] %vm1143, %v1094
          %1168 = vst.msk [vmem:[#allocation2 + $0x60] sm:$0xf] %vm1143, %v1096
          %1169 = vst.msk [vmem:[#allocation2 + $0x64] sm:$0xf] %vm1143, %v1098
          %1170 = vst.msk [vmem:[#allocation2 + $0x68] sm:$0xf] %vm1143, %v1100
          %1171 = vst.msk [vmem:[#allocation2 + $0x6c] sm:$0xf] %vm1143, %v1102
          %1172 = vst.msk [vmem:[#allocation2 + $0x70] sm:$0xf] %vm1143, %v1104
          %1173 = vst.msk [vmem:[#allocation2 + $0x74] sm:$0xf] %vm1143, %v1106
          %1174 = vst.msk [vmem:[#allocation2 + $0x78] sm:$0xf] %vm1143, %v1108
          %1175 = vst.msk [vmem:[#allocation2 + $0x7c] sm:$0xf] %vm1143, %v1110
          %v1176 = vld [vmem:[%s918 + $0x1] sm:$0xff]
          %v1177 = vld [vmem:[%s918 + $0x9] sm:$0xff]
          %v1178 = vld [vmem:[%s918 + $0x19] sm:$0xff]
          %v1179 = vld [vmem:[%s918 + $0x21] sm:$0xff]
          %v1180 = vld [vmem:[%s918 + $0x31] sm:$0xff]
          %v1181 = vld [vmem:[%s918 + $0x39] sm:$0xff]
          %v1182 = vld [vmem:[%s918 + $0x49] sm:$0xff]
          %v1183 = vld [vmem:[%s918 + $0x51] sm:$0xff]
          %v1184 = vld [vmem:[%s918 + $0x61] sm:$0xff]
          %v1185 = vld [vmem:[%s918 + $0x69] sm:$0xff]
          %v1186 = vld [vmem:[%s918 + $0x79] sm:$0xff]
          %v1187 = vld [vmem:[%s918 + $0x81] sm:$0xff]
          %v1188 = vld [vmem:[%s918 + $0x91] sm:$0xff]
          %v1189 = vld [vmem:[%s918 + $0x99] sm:$0xff]
          %v1190 = vld [vmem:[%s918 + $0xa9] sm:$0xff]
          %v1191 = vld [vmem:[%s918 + $0xb1] sm:$0xff]
          %v1192 = vld [vmem:[%s918 + $0xc1] sm:$0xff]
          %v1193 = vld [vmem:[%s918 + $0xc9] sm:$0xff]
          %v1194 = vld [vmem:[%s918 + $0xd9] sm:$0xff]
          %v1195 = vld [vmem:[%s918 + $0xe1] sm:$0xff]
          %v1196 = vld [vmem:[%s918 + $0xf1] sm:$0xff]
          %v1197 = vld [vmem:[%s918 + $0xf9] sm:$0xff]
          %v1198 = vld [vmem:[%s918 + $0x109] sm:$0xff]
          %v1199 = vld [vmem:[%s918 + $0x111] sm:$0xff]
          %v1200 = vld [vmem:[%s918 + $0x121] sm:$0xff]
          %v1201 = vld [vmem:[%s918 + $0x129] sm:$0xff]
          %v1202 = vld [vmem:[%s918 + $0x139] sm:$0xff]
          %v1203 = vld [vmem:[%s918 + $0x141] sm:$0xff]
          %v1204 = vld [vmem:[%s918 + $0x151] sm:$0xff]
          %v1205 = vld [vmem:[%s918 + $0x159] sm:$0xff]
          %v1206 = vld [vmem:[%s918 + $0x169] sm:$0xff]
          %v1207 = vld [vmem:[%s918 + $0x171] sm:$0xff]
          %v1208 = vpack.c.bf16 %v1177, %v1176
          %v1209 = vpack.c.bf16 %v1179, %v1178
          %v1210 = vpack.c.bf16 %v1181, %v1180
          %v1211 = vpack.c.bf16 %v1183, %v1182
          %v1212 = vpack.c.bf16 %v1185, %v1184
          %v1213 = vpack.c.bf16 %v1187, %v1186
          %v1214 = vpack.c.bf16 %v1189, %v1188
          %v1215 = vpack.c.bf16 %v1191, %v1190
          %v1216 = vpack.c.bf16 %v1193, %v1192
          %v1217 = vpack.c.bf16 %v1195, %v1194
          %v1218 = vpack.c.bf16 %v1197, %v1196
          %v1219 = vpack.c.bf16 %v1199, %v1198
          %v1220 = vpack.c.bf16 %v1201, %v1200
          %v1221 = vpack.c.bf16 %v1203, %v1202
          %v1222 = vpack.c.bf16 %v1205, %v1204
          %v1223 = vpack.c.bf16 %v1207, %v1206
          %v1240 = vunpack.c.l.b16 %v1208
          %v1241 = vunpack.c.h.b16 %v1208
          %v1242 = vunpack.c.l.b16 %v1209
          %v1243 = vunpack.c.h.b16 %v1209
          %v1244 = vunpack.c.l.b16 %v1210
          %v1245 = vunpack.c.h.b16 %v1210
          %v1246 = vunpack.c.l.b16 %v1211
          %v1247 = vunpack.c.h.b16 %v1211
          %v1248 = vunpack.c.l.b16 %v1212
          %v1249 = vunpack.c.h.b16 %v1212
          %v1250 = vunpack.c.l.b16 %v1213
          %v1251 = vunpack.c.h.b16 %v1213
          %v1252 = vunpack.c.l.b16 %v1214
          %v1253 = vunpack.c.h.b16 %v1214
          %v1254 = vunpack.c.l.b16 %v1215
          %v1255 = vunpack.c.h.b16 %v1215
          %v1256 = vunpack.c.l.b16 %v1216
          %v1257 = vunpack.c.h.b16 %v1216
          %v1258 = vunpack.c.l.b16 %v1217
          %v1259 = vunpack.c.h.b16 %v1217
          %v1260 = vunpack.c.l.b16 %v1218
          %v1261 = vunpack.c.h.b16 %v1218
          %v1262 = vunpack.c.l.b16 %v1219
          %v1263 = vunpack.c.h.b16 %v1219
          %v1264 = vunpack.c.l.b16 %v1220
          %v1265 = vunpack.c.h.b16 %v1220
          %v1266 = vunpack.c.l.b16 %v1221
          %v1267 = vunpack.c.h.b16 %v1221
          %v1268 = vunpack.c.l.b16 %v1222
          %v1269 = vunpack.c.h.b16 %v1222
          %v1270 = vunpack.c.l.b16 %v1223
          %v1271 = vunpack.c.h.b16 %v1223
          %v1272 = vpack.c.b16 %v1240, %v1240
          %v1273 = vpack.c.b16 %v1241, %v1241
          %v1274 = vpack.c.b16 %v1242, %v1242
          %v1275 = vpack.c.b16 %v1243, %v1243
          %v1276 = vpack.c.b16 %v1244, %v1244
          %v1277 = vpack.c.b16 %v1245, %v1245
          %v1278 = vpack.c.b16 %v1246, %v1246
          %v1279 = vpack.c.b16 %v1247, %v1247
          %v1280 = vpack.c.b16 %v1248, %v1248
          %v1281 = vpack.c.b16 %v1249, %v1249
          %v1282 = vpack.c.b16 %v1250, %v1250
          %v1283 = vpack.c.b16 %v1251, %v1251
          %v1284 = vpack.c.b16 %v1252, %v1252
          %v1285 = vpack.c.b16 %v1253, %v1253
          %v1286 = vpack.c.b16 %v1254, %v1254
          %v1287 = vpack.c.b16 %v1255, %v1255
          %v1288 = vpack.c.b16 %v1256, %v1256
          %v1289 = vpack.c.b16 %v1257, %v1257
          %v1290 = vpack.c.b16 %v1258, %v1258
          %v1291 = vpack.c.b16 %v1259, %v1259
          %v1292 = vpack.c.b16 %v1260, %v1260
          %v1293 = vpack.c.b16 %v1261, %v1261
          %v1294 = vpack.c.b16 %v1262, %v1262
          %v1295 = vpack.c.b16 %v1263, %v1263
          %v1296 = vpack.c.b16 %v1264, %v1264
          %v1297 = vpack.c.b16 %v1265, %v1265
          %v1298 = vpack.c.b16 %v1266, %v1266
          %v1299 = vpack.c.b16 %v1267, %v1267
          %v1300 = vpack.c.b16 %v1268, %v1268
          %v1301 = vpack.c.b16 %v1269, %v1269
          %v1302 = vpack.c.b16 %v1270, %v1270
          %v1303 = vpack.c.b16 %v1271, %v1271
          %1304 = vrot.lane.b32.xlu0 %v1272, 16
          %v1305 = vpop.permute.xlu0 %1304
          %1306 = vrot.lane.b32.xlu0 %v1273, 16
          %v1307 = vpop.permute.xlu0 %1306
          %1308 = vrot.lane.b32.xlu0 %v1274, 16
          %v1309 = vpop.permute.xlu0 %1308
          %1310 = vrot.lane.b32.xlu0 %v1275, 16
          %v1311 = vpop.permute.xlu0 %1310
          %1312 = vrot.lane.b32.xlu0 %v1276, 16
          %v1313 = vpop.permute.xlu0 %1312
          %1314 = vrot.lane.b32.xlu0 %v1277, 16
          %v1315 = vpop.permute.xlu0 %1314
          %1316 = vrot.lane.b32.xlu0 %v1278, 16
          %v1317 = vpop.permute.xlu0 %1316
          %1318 = vrot.lane.b32.xlu0 %v1279, 16
          %v1319 = vpop.permute.xlu0 %1318
          %1320 = vrot.lane.b32.xlu0 %v1280, 16
          %v1321 = vpop.permute.xlu0 %1320
          %1322 = vrot.lane.b32.xlu0 %v1281, 16
          %v1323 = vpop.permute.xlu0 %1322
          %1324 = vrot.lane.b32.xlu0 %v1282, 16
          %v1325 = vpop.permute.xlu0 %1324
          %1326 = vrot.lane.b32.xlu0 %v1283, 16
          %v1327 = vpop.permute.xlu0 %1326
          %1328 = vrot.lane.b32.xlu0 %v1284, 16
          %v1329 = vpop.permute.xlu0 %1328
          %1330 = vrot.lane.b32.xlu0 %v1285, 16
          %v1331 = vpop.permute.xlu0 %1330
          %1332 = vrot.lane.b32.xlu0 %v1286, 16
          %v1333 = vpop.permute.xlu0 %1332
          %1334 = vrot.lane.b32.xlu0 %v1287, 16
          %v1335 = vpop.permute.xlu0 %1334
          %1336 = vrot.lane.b32.xlu0 %v1288, 16
          %v1337 = vpop.permute.xlu0 %1336
          %1338 = vrot.lane.b32.xlu0 %v1289, 16
          %v1339 = vpop.permute.xlu0 %1338
          %1340 = vrot.lane.b32.xlu0 %v1290, 16
          %v1341 = vpop.permute.xlu0 %1340
          %1342 = vrot.lane.b32.xlu0 %v1291, 16
          %v1343 = vpop.permute.xlu0 %1342
          %1344 = vrot.lane.b32.xlu0 %v1292, 16
          %v1345 = vpop.permute.xlu0 %1344
          %1346 = vrot.lane.b32.xlu0 %v1293, 16
          %v1347 = vpop.permute.xlu0 %1346
          %1348 = vrot.lane.b32.xlu0 %v1294, 16
          %v1349 = vpop.permute.xlu0 %1348
          %1350 = vrot.lane.b32.xlu0 %v1295, 16
          %v1351 = vpop.permute.xlu0 %1350
          %1352 = vrot.lane.b32.xlu0 %v1296, 16
          %v1353 = vpop.permute.xlu0 %1352
          %1354 = vrot.lane.b32.xlu0 %v1297, 16
          %v1355 = vpop.permute.xlu0 %1354
          %1356 = vrot.lane.b32.xlu0 %v1298, 16
          %v1357 = vpop.permute.xlu0 %1356
          %1358 = vrot.lane.b32.xlu0 %v1299, 16
          %v1359 = vpop.permute.xlu0 %1358
          %1360 = vrot.lane.b32.xlu0 %v1300, 16
          %v1361 = vpop.permute.xlu0 %1360
          %1362 = vrot.lane.b32.xlu0 %v1301, 16
          %v1363 = vpop.permute.xlu0 %1362
          %1364 = vrot.lane.b32.xlu0 %v1302, 16
          %v1365 = vpop.permute.xlu0 %1364
          %1366 = vrot.lane.b32.xlu0 %v1303, 16
          %v1367 = vpop.permute.xlu0 %1366
          %vm1400 = vcmask 158848
          %1401 = vst.msk [vmem:[#allocation2] sm:$0xf] %vm1400, %v1305
          %1402 = vst.msk [vmem:[#allocation2 + $0x4] sm:$0xf] %vm1400, %v1307
          %1403 = vst.msk [vmem:[#allocation2 + $0x8] sm:$0xf] %vm1400, %v1309
          %1404 = vst.msk [vmem:[#allocation2 + $0xc] sm:$0xf] %vm1400, %v1311
          %1405 = vst.msk [vmem:[#allocation2 + $0x10] sm:$0xf] %vm1400, %v1313
          %1406 = vst.msk [vmem:[#allocation2 + $0x14] sm:$0xf] %vm1400, %v1315
          %1407 = vst.msk [vmem:[#allocation2 + $0x18] sm:$0xf] %vm1400, %v1317
          %1408 = vst.msk [vmem:[#allocation2 + $0x1c] sm:$0xf] %vm1400, %v1319
          %1409 = vst.msk [vmem:[#allocation2 + $0x20] sm:$0xf] %vm1400, %v1321
          %1410 = vst.msk [vmem:[#allocation2 + $0x24] sm:$0xf] %vm1400, %v1323
          %1411 = vst.msk [vmem:[#allocation2 + $0x28] sm:$0xf] %vm1400, %v1325
          %1412 = vst.msk [vmem:[#allocation2 + $0x2c] sm:$0xf] %vm1400, %v1327
          %1413 = vst.msk [vmem:[#allocation2 + $0x30] sm:$0xf] %vm1400, %v1329
          %1414 = vst.msk [vmem:[#allocation2 + $0x34] sm:$0xf] %vm1400, %v1331
          %1415 = vst.msk [vmem:[#allocation2 + $0x38] sm:$0xf] %vm1400, %v1333
          %1416 = vst.msk [vmem:[#allocation2 + $0x3c] sm:$0xf] %vm1400, %v1335
          %1417 = vst.msk [vmem:[#allocation2 + $0x40] sm:$0xf] %vm1400, %v1337
          %1418 = vst.msk [vmem:[#allocation2 + $0x44] sm:$0xf] %vm1400, %v1339
          %1419 = vst.msk [vmem:[#allocation2 + $0x48] sm:$0xf] %vm1400, %v1341
          %1420 = vst.msk [vmem:[#allocation2 + $0x4c] sm:$0xf] %vm1400, %v1343
          %1421 = vst.msk [vmem:[#allocation2 + $0x50] sm:$0xf] %vm1400, %v1345
          %1422 = vst.msk [vmem:[#allocation2 + $0x54] sm:$0xf] %vm1400, %v1347
          %1423 = vst.msk [vmem:[#allocation2 + $0x58] sm:$0xf] %vm1400, %v1349
          %1424 = vst.msk [vmem:[#allocation2 + $0x5c] sm:$0xf] %vm1400, %v1351
          %1425 = vst.msk [vmem:[#allocation2 + $0x60] sm:$0xf] %vm1400, %v1353
          %1426 = vst.msk [vmem:[#allocation2 + $0x64] sm:$0xf] %vm1400, %v1355
          %1427 = vst.msk [vmem:[#allocation2 + $0x68] sm:$0xf] %vm1400, %v1357
          %1428 = vst.msk [vmem:[#allocation2 + $0x6c] sm:$0xf] %vm1400, %v1359
          %1429 = vst.msk [vmem:[#allocation2 + $0x70] sm:$0xf] %vm1400, %v1361
          %1430 = vst.msk [vmem:[#allocation2 + $0x74] sm:$0xf] %vm1400, %v1363
          %1431 = vst.msk [vmem:[#allocation2 + $0x78] sm:$0xf] %vm1400, %v1365
          %1432 = vst.msk [vmem:[#allocation2 + $0x7c] sm:$0xf] %vm1400, %v1367
          %v1433 = vld [vmem:[%s918 + $0x2] sm:$0xff]
          %v1434 = vld [vmem:[%s918 + $0xa] sm:$0xff]
          %v1435 = vld [vmem:[%s918 + $0x1a] sm:$0xff]
          %v1436 = vld [vmem:[%s918 + $0x22] sm:$0xff]
          %v1437 = vld [vmem:[%s918 + $0x32] sm:$0xff]
          %v1438 = vld [vmem:[%s918 + $0x3a] sm:$0xff]
          %v1439 = vld [vmem:[%s918 + $0x4a] sm:$0xff]
          %v1440 = vld [vmem:[%s918 + $0x52] sm:$0xff]
          %v1441 = vld [vmem:[%s918 + $0x62] sm:$0xff]
          %v1442 = vld [vmem:[%s918 + $0x6a] sm:$0xff]
          %v1443 = vld [vmem:[%s918 + $0x7a] sm:$0xff]
          %v1444 = vld [vmem:[%s918 + $0x82] sm:$0xff]
          %v1445 = vld [vmem:[%s918 + $0x92] sm:$0xff]
          %v1446 = vld [vmem:[%s918 + $0x9a] sm:$0xff]
          %v1447 = vld [vmem:[%s918 + $0xaa] sm:$0xff]
          %v1448 = vld [vmem:[%s918 + $0xb2] sm:$0xff]
          %v1449 = vld [vmem:[%s918 + $0xc2] sm:$0xff]
          %v1450 = vld [vmem:[%s918 + $0xca] sm:$0xff]
          %v1451 = vld [vmem:[%s918 + $0xda] sm:$0xff]
          %v1452 = vld [vmem:[%s918 + $0xe2] sm:$0xff]
          %v1453 = vld [vmem:[%s918 + $0xf2] sm:$0xff]
          %v1454 = vld [vmem:[%s918 + $0xfa] sm:$0xff]
          %v1455 = vld [vmem:[%s918 + $0x10a] sm:$0xff]
          %v1456 = vld [vmem:[%s918 + $0x112] sm:$0xff]
          %v1457 = vld [vmem:[%s918 + $0x122] sm:$0xff]
          %v1458 = vld [vmem:[%s918 + $0x12a] sm:$0xff]
          %v1459 = vld [vmem:[%s918 + $0x13a] sm:$0xff]
          %v1460 = vld [vmem:[%s918 + $0x142] sm:$0xff]
          %v1461 = vld [vmem:[%s918 + $0x152] sm:$0xff]
          %v1462 = vld [vmem:[%s918 + $0x15a] sm:$0xff]
          %v1463 = vld [vmem:[%s918 + $0x16a] sm:$0xff]
          %v1464 = vld [vmem:[%s918 + $0x172] sm:$0xff]
          %v1465 = vpack.c.bf16 %v1434, %v1433
          %v1466 = vpack.c.bf16 %v1436, %v1435
          %v1467 = vpack.c.bf16 %v1438, %v1437
          %v1468 = vpack.c.bf16 %v1440, %v1439
          %v1469 = vpack.c.bf16 %v1442, %v1441
          %v1470 = vpack.c.bf16 %v1444, %v1443
          %v1471 = vpack.c.bf16 %v1446, %v1445
          %v1472 = vpack.c.bf16 %v1448, %v1447
          %v1473 = vpack.c.bf16 %v1450, %v1449
          %v1474 = vpack.c.bf16 %v1452, %v1451
          %v1475 = vpack.c.bf16 %v1454, %v1453
          %v1476 = vpack.c.bf16 %v1456, %v1455
          %v1477 = vpack.c.bf16 %v1458, %v1457
          %v1478 = vpack.c.bf16 %v1460, %v1459
          %v1479 = vpack.c.bf16 %v1462, %v1461
          %v1480 = vpack.c.bf16 %v1464, %v1463
          %v1497 = vunpack.c.l.b16 %v1465
          %v1498 = vunpack.c.h.b16 %v1465
          %v1499 = vunpack.c.l.b16 %v1466
          %v1500 = vunpack.c.h.b16 %v1466
          %v1501 = vunpack.c.l.b16 %v1467
          %v1502 = vunpack.c.h.b16 %v1467
          %v1503 = vunpack.c.l.b16 %v1468
          %v1504 = vunpack.c.h.b16 %v1468
          %v1505 = vunpack.c.l.b16 %v1469
          %v1506 = vunpack.c.h.b16 %v1469
          %v1507 = vunpack.c.l.b16 %v1470
          %v1508 = vunpack.c.h.b16 %v1470
          %v1509 = vunpack.c.l.b16 %v1471
          %v1510 = vunpack.c.h.b16 %v1471
          %v1511 = vunpack.c.l.b16 %v1472
          %v1512 = vunpack.c.h.b16 %v1472
          %v1513 = vunpack.c.l.b16 %v1473
          %v1514 = vunpack.c.h.b16 %v1473
          %v1515 = vunpack.c.l.b16 %v1474
          %v1516 = vunpack.c.h.b16 %v1474
          %v1517 = vunpack.c.l.b16 %v1475
          %v1518 = vunpack.c.h.b16 %v1475
          %v1519 = vunpack.c.l.b16 %v1476
          %v1520 = vunpack.c.h.b16 %v1476
          %v1521 = vunpack.c.l.b16 %v1477
          %v1522 = vunpack.c.h.b16 %v1477
          %v1523 = vunpack.c.l.b16 %v1478
          %v1524 = vunpack.c.h.b16 %v1478
          %v1525 = vunpack.c.l.b16 %v1479
          %v1526 = vunpack.c.h.b16 %v1479
          %v1527 = vunpack.c.l.b16 %v1480
          %v1528 = vunpack.c.h.b16 %v1480
          %v1529 = vpack.c.b16 %v1497, %v1497
          %v1530 = vpack.c.b16 %v1498, %v1498
          %v1531 = vpack.c.b16 %v1499, %v1499
          %v1532 = vpack.c.b16 %v1500, %v1500
          %v1533 = vpack.c.b16 %v1501, %v1501
          %v1534 = vpack.c.b16 %v1502, %v1502
          %v1535 = vpack.c.b16 %v1503, %v1503
          %v1536 = vpack.c.b16 %v1504, %v1504
          %v1537 = vpack.c.b16 %v1505, %v1505
          %v1538 = vpack.c.b16 %v1506, %v1506
          %v1539 = vpack.c.b16 %v1507, %v1507
          %v1540 = vpack.c.b16 %v1508, %v1508
          %v1541 = vpack.c.b16 %v1509, %v1509
          %v1542 = vpack.c.b16 %v1510, %v1510
          %v1543 = vpack.c.b16 %v1511, %v1511
          %v1544 = vpack.c.b16 %v1512, %v1512
          %v1545 = vpack.c.b16 %v1513, %v1513
          %v1546 = vpack.c.b16 %v1514, %v1514
          %v1547 = vpack.c.b16 %v1515, %v1515
          %v1548 = vpack.c.b16 %v1516, %v1516
          %v1549 = vpack.c.b16 %v1517, %v1517
          %v1550 = vpack.c.b16 %v1518, %v1518
          %v1551 = vpack.c.b16 %v1519, %v1519
          %v1552 = vpack.c.b16 %v1520, %v1520
          %v1553 = vpack.c.b16 %v1521, %v1521
          %v1554 = vpack.c.b16 %v1522, %v1522
          %v1555 = vpack.c.b16 %v1523, %v1523
          %v1556 = vpack.c.b16 %v1524, %v1524
          %v1557 = vpack.c.b16 %v1525, %v1525
          %v1558 = vpack.c.b16 %v1526, %v1526
          %v1559 = vpack.c.b16 %v1527, %v1527
          %v1560 = vpack.c.b16 %v1528, %v1528
          %1561 = vrot.lane.b32.xlu0 %v1529, 20
          %v1562 = vpop.permute.xlu0 %1561
          %1563 = vrot.lane.b32.xlu0 %v1530, 20
          %v1564 = vpop.permute.xlu0 %1563
          %1565 = vrot.lane.b32.xlu0 %v1531, 20
          %v1566 = vpop.permute.xlu0 %1565
          %1567 = vrot.lane.b32.xlu0 %v1532, 20
          %v1568 = vpop.permute.xlu0 %1567
          %1569 = vrot.lane.b32.xlu0 %v1533, 20
          %v1570 = vpop.permute.xlu0 %1569
          %1571 = vrot.lane.b32.xlu0 %v1534, 20
          %v1572 = vpop.permute.xlu0 %1571
          %1573 = vrot.lane.b32.xlu0 %v1535, 20
          %v1574 = vpop.permute.xlu0 %1573
          %1575 = vrot.lane.b32.xlu0 %v1536, 20
          %v1576 = vpop.permute.xlu0 %1575
          %1577 = vrot.lane.b32.xlu0 %v1537, 20
          %v1578 = vpop.permute.xlu0 %1577
          %1579 = vrot.lane.b32.xlu0 %v1538, 20
          %v1580 = vpop.permute.xlu0 %1579
          %1581 = vrot.lane.b32.xlu0 %v1539, 20
          %v1582 = vpop.permute.xlu0 %1581
          %1583 = vrot.lane.b32.xlu0 %v1540, 20
          %v1584 = vpop.permute.xlu0 %1583
          %1585 = vrot.lane.b32.xlu0 %v1541, 20
          %v1586 = vpop.permute.xlu0 %1585
          %1587 = vrot.lane.b32.xlu0 %v1542, 20
          %v1588 = vpop.permute.xlu0 %1587
          %1589 = vrot.lane.b32.xlu0 %v1543, 20
          %v1590 = vpop.permute.xlu0 %1589
          %1591 = vrot.lane.b32.xlu0 %v1544, 20
          %v1592 = vpop.permute.xlu0 %1591
          %1593 = vrot.lane.b32.xlu0 %v1545, 20
          %v1594 = vpop.permute.xlu0 %1593
          %1595 = vrot.lane.b32.xlu0 %v1546, 20
          %v1596 = vpop.permute.xlu0 %1595
          %1597 = vrot.lane.b32.xlu0 %v1547, 20
          %v1598 = vpop.permute.xlu0 %1597
          %1599 = vrot.lane.b32.xlu0 %v1548, 20
          %v1600 = vpop.permute.xlu0 %1599
          %1601 = vrot.lane.b32.xlu0 %v1549, 20
          %v1602 = vpop.permute.xlu0 %1601
          %1603 = vrot.lane.b32.xlu0 %v1550, 20
          %v1604 = vpop.permute.xlu0 %1603
          %1605 = vrot.lane.b32.xlu0 %v1551, 20
          %v1606 = vpop.permute.xlu0 %1605
          %1607 = vrot.lane.b32.xlu0 %v1552, 20
          %v1608 = vpop.permute.xlu0 %1607
          %1609 = vrot.lane.b32.xlu0 %v1553, 20
          %v1610 = vpop.permute.xlu0 %1609
          %1611 = vrot.lane.b32.xlu0 %v1554, 20
          %v1612 = vpop.permute.xlu0 %1611
          %1613 = vrot.lane.b32.xlu0 %v1555, 20
          %v1614 = vpop.permute.xlu0 %1613
          %1615 = vrot.lane.b32.xlu0 %v1556, 20
          %v1616 = vpop.permute.xlu0 %1615
          %1617 = vrot.lane.b32.xlu0 %v1557, 20
          %v1618 = vpop.permute.xlu0 %1617
          %1619 = vrot.lane.b32.xlu0 %v1558, 20
          %v1620 = vpop.permute.xlu0 %1619
          %1621 = vrot.lane.b32.xlu0 %v1559, 20
          %v1622 = vpop.permute.xlu0 %1621
          %1623 = vrot.lane.b32.xlu0 %v1560, 20
          %v1624 = vpop.permute.xlu0 %1623
          %vm1657 = vcmask 191648
          %1658 = vst.msk [vmem:[#allocation2] sm:$0xf] %vm1657, %v1562
          %1659 = vst.msk [vmem:[#allocation2 + $0x4] sm:$0xf] %vm1657, %v1564
          %1660 = vst.msk [vmem:[#allocation2 + $0x8] sm:$0xf] %vm1657, %v1566
          %1661 = vst.msk [vmem:[#allocation2 + $0xc] sm:$0xf] %vm1657, %v1568
          %1662 = vst.msk [vmem:[#allocation2 + $0x10] sm:$0xf] %vm1657, %v1570
          %1663 = vst.msk [vmem:[#allocation2 + $0x14] sm:$0xf] %vm1657, %v1572
          %1664 = vst.msk [vmem:[#allocation2 + $0x18] sm:$0xf] %vm1657, %v1574
          %1665 = vst.msk [vmem:[#allocation2 + $0x1c] sm:$0xf] %vm1657, %v1576
          %1666 = vst.msk [vmem:[#allocation2 + $0x20] sm:$0xf] %vm1657, %v1578
          %1667 = vst.msk [vmem:[#allocation2 + $0x24] sm:$0xf] %vm1657, %v1580
          %1668 = vst.msk [vmem:[#allocation2 + $0x28] sm:$0xf] %vm1657, %v1582
          %1669 = vst.msk [vmem:[#allocation2 + $0x2c] sm:$0xf] %vm1657, %v1584
          %1670 = vst.msk [vmem:[#allocation2 + $0x30] sm:$0xf] %vm1657, %v1586
          %1671 = vst.msk [vmem:[#allocation2 + $0x34] sm:$0xf] %vm1657, %v1588
          %1672 = vst.msk [vmem:[#allocation2 + $0x38] sm:$0xf] %vm1657, %v1590
          %1673 = vst.msk [vmem:[#allocation2 + $0x3c] sm:$0xf] %vm1657, %v1592
          %1674 = vst.msk [vmem:[#allocation2 + $0x40] sm:$0xf] %vm1657, %v1594
          %1675 = vst.msk [vmem:[#allocation2 + $0x44] sm:$0xf] %vm1657, %v1596
          %1676 = vst.msk [vmem:[#allocation2 + $0x48] sm:$0xf] %vm1657, %v1598
          %1677 = vst.msk [vmem:[#allocation2 + $0x4c] sm:$0xf] %vm1657, %v1600
          %1678 = vst.msk [vmem:[#allocation2 + $0x50] sm:$0xf] %vm1657, %v1602
          %1679 = vst.msk [vmem:[#allocation2 + $0x54] sm:$0xf] %vm1657, %v1604
          %1680 = vst.msk [vmem:[#allocation2 + $0x58] sm:$0xf] %vm1657, %v1606
          %1681 = vst.msk [vmem:[#allocation2 + $0x5c] sm:$0xf] %vm1657, %v1608
          %1682 = vst.msk [vmem:[#allocation2 + $0x60] sm:$0xf] %vm1657, %v1610
          %1683 = vst.msk [vmem:[#allocation2 + $0x64] sm:$0xf] %vm1657, %v1612
          %1684 = vst.msk [vmem:[#allocation2 + $0x68] sm:$0xf] %vm1657, %v1614
          %1685 = vst.msk [vmem:[#allocation2 + $0x6c] sm:$0xf] %vm1657, %v1616
          %1686 = vst.msk [vmem:[#allocation2 + $0x70] sm:$0xf] %vm1657, %v1618
          %1687 = vst.msk [vmem:[#allocation2 + $0x74] sm:$0xf] %vm1657, %v1620
          %1688 = vst.msk [vmem:[#allocation2 + $0x78] sm:$0xf] %vm1657, %v1622
          %1689 = vst.msk [vmem:[#allocation2 + $0x7c] sm:$0xf] %vm1657, %v1624
          %s1690 = scalar_lea.vmem %s168, 48
          %v1691 = vld [vmem:[%s1690] sm:$0xff]
          %v1692 = vld [vmem:[%s1690 + $0x8] sm:$0xff]
          %v1693 = vld [vmem:[%s1690 + $0x18] sm:$0xff]
          %v1694 = vld [vmem:[%s1690 + $0x20] sm:$0xff]
          %v1695 = vld [vmem:[%s1690 + $0x30] sm:$0xff]
          %v1696 = vld [vmem:[%s1690 + $0x38] sm:$0xff]
          %v1697 = vld [vmem:[%s1690 + $0x48] sm:$0xff]
          %v1698 = vld [vmem:[%s1690 + $0x50] sm:$0xff]
          %v1699 = vld [vmem:[%s1690 + $0x60] sm:$0xff]
          %v1700 = vld [vmem:[%s1690 + $0x68] sm:$0xff]
          %v1701 = vld [vmem:[%s1690 + $0x78] sm:$0xff]
          %v1702 = vld [vmem:[%s1690 + $0x80] sm:$0xff]
          %v1703 = vld [vmem:[%s1690 + $0x90] sm:$0xff]
          %v1704 = vld [vmem:[%s1690 + $0x98] sm:$0xff]
          %v1705 = vld [vmem:[%s1690 + $0xa8] sm:$0xff]
          %v1706 = vld [vmem:[%s1690 + $0xb0] sm:$0xff]
          %v1707 = vld [vmem:[%s1690 + $0xc0] sm:$0xff]
          %v1708 = vld [vmem:[%s1690 + $0xc8] sm:$0xff]
          %v1709 = vld [vmem:[%s1690 + $0xd8] sm:$0xff]
          %v1710 = vld [vmem:[%s1690 + $0xe0] sm:$0xff]
          %v1711 = vld [vmem:[%s1690 + $0xf0] sm:$0xff]
          %v1712 = vld [vmem:[%s1690 + $0xf8] sm:$0xff]
          %v1713 = vld [vmem:[%s1690 + $0x108] sm:$0xff]
          %v1714 = vld [vmem:[%s1690 + $0x110] sm:$0xff]
          %v1715 = vld [vmem:[%s1690 + $0x120] sm:$0xff]
          %v1716 = vld [vmem:[%s1690 + $0x128] sm:$0xff]
          %v1717 = vld [vmem:[%s1690 + $0x138] sm:$0xff]
          %v1718 = vld [vmem:[%s1690 + $0x140] sm:$0xff]
          %v1719 = vld [vmem:[%s1690 + $0x150] sm:$0xff]
          %v1720 = vld [vmem:[%s1690 + $0x158] sm:$0xff]
          %v1721 = vld [vmem:[%s1690 + $0x168] sm:$0xff]
          %v1722 = vld [vmem:[%s1690 + $0x170] sm:$0xff]
          %v1723 = vpack.c.bf16 %v1692, %v1691
          %v1724 = vpack.c.bf16 %v1694, %v1693
          %v1725 = vpack.c.bf16 %v1696, %v1695
          %v1726 = vpack.c.bf16 %v1698, %v1697
          %v1727 = vpack.c.bf16 %v1700, %v1699
          %v1728 = vpack.c.bf16 %v1702, %v1701
          %v1729 = vpack.c.bf16 %v1704, %v1703
          %v1730 = vpack.c.bf16 %v1706, %v1705
          %v1731 = vpack.c.bf16 %v1708, %v1707
          %v1732 = vpack.c.bf16 %v1710, %v1709
          %v1733 = vpack.c.bf16 %v1712, %v1711
          %v1734 = vpack.c.bf16 %v1714, %v1713
          %v1735 = vpack.c.bf16 %v1716, %v1715
          %v1736 = vpack.c.bf16 %v1718, %v1717
          %v1737 = vpack.c.bf16 %v1720, %v1719
          %v1738 = vpack.c.bf16 %v1722, %v1721
          %v1755 = vunpack.c.l.b16 %v1723
          %v1756 = vunpack.c.h.b16 %v1723
          %v1757 = vunpack.c.l.b16 %v1724
          %v1758 = vunpack.c.h.b16 %v1724
          %v1759 = vunpack.c.l.b16 %v1725
          %v1760 = vunpack.c.h.b16 %v1725
          %v1761 = vunpack.c.l.b16 %v1726
          %v1762 = vunpack.c.h.b16 %v1726
          %v1763 = vunpack.c.l.b16 %v1727
          %v1764 = vunpack.c.h.b16 %v1727
          %v1765 = vunpack.c.l.b16 %v1728
          %v1766 = vunpack.c.h.b16 %v1728
          %v1767 = vunpack.c.l.b16 %v1729
          %v1768 = vunpack.c.h.b16 %v1729
          %v1769 = vunpack.c.l.b16 %v1730
          %v1770 = vunpack.c.h.b16 %v1730
          %v1771 = vunpack.c.l.b16 %v1731
          %v1772 = vunpack.c.h.b16 %v1731
          %v1773 = vunpack.c.l.b16 %v1732
          %v1774 = vunpack.c.h.b16 %v1732
          %v1775 = vunpack.c.l.b16 %v1733
          %v1776 = vunpack.c.h.b16 %v1733
          %v1777 = vunpack.c.l.b16 %v1734
          %v1778 = vunpack.c.h.b16 %v1734
          %v1779 = vunpack.c.l.b16 %v1735
          %v1780 = vunpack.c.h.b16 %v1735
          %v1781 = vunpack.c.l.b16 %v1736
          %v1782 = vunpack.c.h.b16 %v1736
          %v1783 = vunpack.c.l.b16 %v1737
          %v1784 = vunpack.c.h.b16 %v1737
          %v1785 = vunpack.c.l.b16 %v1738
          %v1786 = vunpack.c.h.b16 %v1738
          %v1787 = vpack.c.b16 %v1755, %v1755
          %v1788 = vpack.c.b16 %v1756, %v1756
          %v1789 = vpack.c.b16 %v1757, %v1757
          %v1790 = vpack.c.b16 %v1758, %v1758
          %v1791 = vpack.c.b16 %v1759, %v1759
          %v1792 = vpack.c.b16 %v1760, %v1760
          %v1793 = vpack.c.b16 %v1761, %v1761
          %v1794 = vpack.c.b16 %v1762, %v1762
          %v1795 = vpack.c.b16 %v1763, %v1763
          %v1796 = vpack.c.b16 %v1764, %v1764
          %v1797 = vpack.c.b16 %v1765, %v1765
          %v1798 = vpack.c.b16 %v1766, %v1766
          %v1799 = vpack.c.b16 %v1767, %v1767
          %v1800 = vpack.c.b16 %v1768, %v1768
          %v1801 = vpack.c.b16 %v1769, %v1769
          %v1802 = vpack.c.b16 %v1770, %v1770
          %v1803 = vpack.c.b16 %v1771, %v1771
          %v1804 = vpack.c.b16 %v1772, %v1772
          %v1805 = vpack.c.b16 %v1773, %v1773
          %v1806 = vpack.c.b16 %v1774, %v1774
          %v1807 = vpack.c.b16 %v1775, %v1775
          %v1808 = vpack.c.b16 %v1776, %v1776
          %v1809 = vpack.c.b16 %v1777, %v1777
          %v1810 = vpack.c.b16 %v1778, %v1778
          %v1811 = vpack.c.b16 %v1779, %v1779
          %v1812 = vpack.c.b16 %v1780, %v1780
          %v1813 = vpack.c.b16 %v1781, %v1781
          %v1814 = vpack.c.b16 %v1782, %v1782
          %v1815 = vpack.c.b16 %v1783, %v1783
          %v1816 = vpack.c.b16 %v1784, %v1784
          %v1817 = vpack.c.b16 %v1785, %v1785
          %v1818 = vpack.c.b16 %v1786, %v1786
          %1819 = vrot.lane.b32.xlu0 %v1787, 24
          %v1820 = vpop.permute.xlu0 %1819
          %1821 = vrot.lane.b32.xlu0 %v1788, 24
          %v1822 = vpop.permute.xlu0 %1821
          %1823 = vrot.lane.b32.xlu0 %v1789, 24
          %v1824 = vpop.permute.xlu0 %1823
          %1825 = vrot.lane.b32.xlu0 %v1790, 24
          %v1826 = vpop.permute.xlu0 %1825
          %1827 = vrot.lane.b32.xlu0 %v1791, 24
          %v1828 = vpop.permute.xlu0 %1827
          %1829 = vrot.lane.b32.xlu0 %v1792, 24
          %v1830 = vpop.permute.xlu0 %1829
          %1831 = vrot.lane.b32.xlu0 %v1793, 24
          %v1832 = vpop.permute.xlu0 %1831
          %1833 = vrot.lane.b32.xlu0 %v1794, 24
          %v1834 = vpop.permute.xlu0 %1833
          %1835 = vrot.lane.b32.xlu0 %v1795, 24
          %v1836 = vpop.permute.xlu0 %1835
          %1837 = vrot.lane.b32.xlu0 %v1796, 24
          %v1838 = vpop.permute.xlu0 %1837
          %1839 = vrot.lane.b32.xlu0 %v1797, 24
          %v1840 = vpop.permute.xlu0 %1839
          %1841 = vrot.lane.b32.xlu0 %v1798, 24
          %v1842 = vpop.permute.xlu0 %1841
          %1843 = vrot.lane.b32.xlu0 %v1799, 24
          %v1844 = vpop.permute.xlu0 %1843
          %1845 = vrot.lane.b32.xlu0 %v1800, 24
          %v1846 = vpop.permute.xlu0 %1845
          %1847 = vrot.lane.b32.xlu0 %v1801, 24
          %v1848 = vpop.permute.xlu0 %1847
          %1849 = vrot.lane.b32.xlu0 %v1802, 24
          %v1850 = vpop.permute.xlu0 %1849
          %1851 = vrot.lane.b32.xlu0 %v1803, 24
          %v1852 = vpop.permute.xlu0 %1851
          %1853 = vrot.lane.b32.xlu0 %v1804, 24
          %v1854 = vpop.permute.xlu0 %1853
          %1855 = vrot.lane.b32.xlu0 %v1805, 24
          %v1856 = vpop.permute.xlu0 %1855
          %1857 = vrot.lane.b32.xlu0 %v1806, 24
          %v1858 = vpop.permute.xlu0 %1857
          %1859 = vrot.lane.b32.xlu0 %v1807, 24
          %v1860 = vpop.permute.xlu0 %1859
          %1861 = vrot.lane.b32.xlu0 %v1808, 24
          %v1862 = vpop.permute.xlu0 %1861
          %1863 = vrot.lane.b32.xlu0 %v1809, 24
          %v1864 = vpop.permute.xlu0 %1863
          %1865 = vrot.lane.b32.xlu0 %v1810, 24
          %v1866 = vpop.permute.xlu0 %1865
          %1867 = vrot.lane.b32.xlu0 %v1811, 24
          %v1868 = vpop.permute.xlu0 %1867
          %1869 = vrot.lane.b32.xlu0 %v1812, 24
          %v1870 = vpop.permute.xlu0 %1869
          %1871 = vrot.lane.b32.xlu0 %v1813, 24
          %v1872 = vpop.permute.xlu0 %1871
          %1873 = vrot.lane.b32.xlu0 %v1814, 24
          %v1874 = vpop.permute.xlu0 %1873
          %1875 = vrot.lane.b32.xlu0 %v1815, 24
          %v1876 = vpop.permute.xlu0 %1875
          %1877 = vrot.lane.b32.xlu0 %v1816, 24
          %v1878 = vpop.permute.xlu0 %1877
          %1879 = vrot.lane.b32.xlu0 %v1817, 24
          %v1880 = vpop.permute.xlu0 %1879
          %1881 = vrot.lane.b32.xlu0 %v1818, 24
          %v1882 = vpop.permute.xlu0 %1881
          %vm1915 = vcmask 224448
          %1916 = vst.msk [vmem:[#allocation2] sm:$0xf] %vm1915, %v1820
          %1917 = vst.msk [vmem:[#allocation2 + $0x4] sm:$0xf] %vm1915, %v1822
          %1918 = vst.msk [vmem:[#allocation2 + $0x8] sm:$0xf] %vm1915, %v1824
          %1919 = vst.msk [vmem:[#allocation2 + $0xc] sm:$0xf] %vm1915, %v1826
          %1920 = vst.msk [vmem:[#allocation2 + $0x10] sm:$0xf] %vm1915, %v1828
          %1921 = vst.msk [vmem:[#allocation2 + $0x14] sm:$0xf] %vm1915, %v1830
          %1922 = vst.msk [vmem:[#allocation2 + $0x18] sm:$0xf] %vm1915, %v1832
          %1923 = vst.msk [vmem:[#allocation2 + $0x1c] sm:$0xf] %vm1915, %v1834
          %1924 = vst.msk [vmem:[#allocation2 + $0x20] sm:$0xf] %vm1915, %v1836
          %1925 = vst.msk [vmem:[#allocation2 + $0x24] sm:$0xf] %vm1915, %v1838
          %1926 = vst.msk [vmem:[#allocation2 + $0x28] sm:$0xf] %vm1915, %v1840
          %1927 = vst.msk [vmem:[#allocation2 + $0x2c] sm:$0xf] %vm1915, %v1842
          %1928 = vst.msk [vmem:[#allocation2 + $0x30] sm:$0xf] %vm1915, %v1844
          %1929 = vst.msk [vmem:[#allocation2 + $0x34] sm:$0xf] %vm1915, %v1846
          %1930 = vst.msk [vmem:[#allocation2 + $0x38] sm:$0xf] %vm1915, %v1848
          %1931 = vst.msk [vmem:[#allocation2 + $0x3c] sm:$0xf] %vm1915, %v1850
          %1932 = vst.msk [vmem:[#allocation2 + $0x40] sm:$0xf] %vm1915, %v1852
          %1933 = vst.msk [vmem:[#allocation2 + $0x44] sm:$0xf] %vm1915, %v1854
          %1934 = vst.msk [vmem:[#allocation2 + $0x48] sm:$0xf] %vm1915, %v1856
          %1935 = vst.msk [vmem:[#allocation2 + $0x4c] sm:$0xf] %vm1915, %v1858
          %1936 = vst.msk [vmem:[#allocation2 + $0x50] sm:$0xf] %vm1915, %v1860
          %1937 = vst.msk [vmem:[#allocation2 + $0x54] sm:$0xf] %vm1915, %v1862
          %1938 = vst.msk [vmem:[#allocation2 + $0x58] sm:$0xf] %vm1915, %v1864
          %1939 = vst.msk [vmem:[#allocation2 + $0x5c] sm:$0xf] %vm1915, %v1866
          %1940 = vst.msk [vmem:[#allocation2 + $0x60] sm:$0xf] %vm1915, %v1868
          %1941 = vst.msk [vmem:[#allocation2 + $0x64] sm:$0xf] %vm1915, %v1870
          %1942 = vst.msk [vmem:[#allocation2 + $0x68] sm:$0xf] %vm1915, %v1872
          %1943 = vst.msk [vmem:[#allocation2 + $0x6c] sm:$0xf] %vm1915, %v1874
          %1944 = vst.msk [vmem:[#allocation2 + $0x70] sm:$0xf] %vm1915, %v1876
          %1945 = vst.msk [vmem:[#allocation2 + $0x74] sm:$0xf] %vm1915, %v1878
          %1946 = vst.msk [vmem:[#allocation2 + $0x78] sm:$0xf] %vm1915, %v1880
          %1947 = vst.msk [vmem:[#allocation2 + $0x7c] sm:$0xf] %vm1915, %v1882
          %v1948 = vld [vmem:[%s1690 + $0x1] sm:$0xff]
          %v1949 = vld [vmem:[%s1690 + $0x9] sm:$0xff]
          %v1950 = vld [vmem:[%s1690 + $0x19] sm:$0xff]
          %v1951 = vld [vmem:[%s1690 + $0x21] sm:$0xff]
          %v1952 = vld [vmem:[%s1690 + $0x31] sm:$0xff]
          %v1953 = vld [vmem:[%s1690 + $0x39] sm:$0xff]
          %v1954 = vld [vmem:[%s1690 + $0x49] sm:$0xff]
          %v1955 = vld [vmem:[%s1690 + $0x51] sm:$0xff]
          %v1956 = vld [vmem:[%s1690 + $0x61] sm:$0xff]
          %v1957 = vld [vmem:[%s1690 + $0x69] sm:$0xff]
          %v1958 = vld [vmem:[%s1690 + $0x79] sm:$0xff]
          %v1959 = vld [vmem:[%s1690 + $0x81] sm:$0xff]
          %v1960 = vld [vmem:[%s1690 + $0x91] sm:$0xff]
          %v1961 = vld [vmem:[%s1690 + $0x99] sm:$0xff]
          %v1962 = vld [vmem:[%s1690 + $0xa9] sm:$0xff]
          %v1963 = vld [vmem:[%s1690 + $0xb1] sm:$0xff]
          %v1964 = vld [vmem:[%s1690 + $0xc1] sm:$0xff]
          %v1965 = vld [vmem:[%s1690 + $0xc9] sm:$0xff]
          %v1966 = vld [vmem:[%s1690 + $0xd9] sm:$0xff]
          %v1967 = vld [vmem:[%s1690 + $0xe1] sm:$0xff]
          %v1968 = vld [vmem:[%s1690 + $0xf1] sm:$0xff]
          %v1969 = vld [vmem:[%s1690 + $0xf9] sm:$0xff]
          %v1970 = vld [vmem:[%s1690 + $0x109] sm:$0xff]
          %v1971 = vld [vmem:[%s1690 + $0x111] sm:$0xff]
          %v1972 = vld [vmem:[%s1690 + $0x121] sm:$0xff]
          %v1973 = vld [vmem:[%s1690 + $0x129] sm:$0xff]
          %v1974 = vld [vmem:[%s1690 + $0x139] sm:$0xff]
          %v1975 = vld [vmem:[%s1690 + $0x141] sm:$0xff]
          %v1976 = vld [vmem:[%s1690 + $0x151] sm:$0xff]
          %v1977 = vld [vmem:[%s1690 + $0x159] sm:$0xff]
          %v1978 = vld [vmem:[%s1690 + $0x169] sm:$0xff]
          %v1979 = vld [vmem:[%s1690 + $0x171] sm:$0xff]
          %v1980 = vpack.c.bf16 %v1949, %v1948
          %v1981 = vpack.c.bf16 %v1951, %v1950
          %v1982 = vpack.c.bf16 %v1953, %v1952
          %v1983 = vpack.c.bf16 %v1955, %v1954
          %v1984 = vpack.c.bf16 %v1957, %v1956
          %v1985 = vpack.c.bf16 %v1959, %v1958
          %v1986 = vpack.c.bf16 %v1961, %v1960
          %v1987 = vpack.c.bf16 %v1963, %v1962
          %v1988 = vpack.c.bf16 %v1965, %v1964
          %v1989 = vpack.c.bf16 %v1967, %v1966
          %v1990 = vpack.c.bf16 %v1969, %v1968
          %v1991 = vpack.c.bf16 %v1971, %v1970
          %v1992 = vpack.c.bf16 %v1973, %v1972
          %v1993 = vpack.c.bf16 %v1975, %v1974
          %v1994 = vpack.c.bf16 %v1977, %v1976
          %v1995 = vpack.c.bf16 %v1979, %v1978
          %v2012 = vunpack.c.l.b16 %v1980
          %v2013 = vunpack.c.h.b16 %v1980
          %v2014 = vunpack.c.l.b16 %v1981
          %v2015 = vunpack.c.h.b16 %v1981
          %v2016 = vunpack.c.l.b16 %v1982
          %v2017 = vunpack.c.h.b16 %v1982
          %v2018 = vunpack.c.l.b16 %v1983
          %v2019 = vunpack.c.h.b16 %v1983
          %v2020 = vunpack.c.l.b16 %v1984
          %v2021 = vunpack.c.h.b16 %v1984
          %v2022 = vunpack.c.l.b16 %v1985
          %v2023 = vunpack.c.h.b16 %v1985
          %v2024 = vunpack.c.l.b16 %v1986
          %v2025 = vunpack.c.h.b16 %v1986
          %v2026 = vunpack.c.l.b16 %v1987
          %v2027 = vunpack.c.h.b16 %v1987
          %v2028 = vunpack.c.l.b16 %v1988
          %v2029 = vunpack.c.h.b16 %v1988
          %v2030 = vunpack.c.l.b16 %v1989
          %v2031 = vunpack.c.h.b16 %v1989
          %v2032 = vunpack.c.l.b16 %v1990
          %v2033 = vunpack.c.h.b16 %v1990
          %v2034 = vunpack.c.l.b16 %v1991
          %v2035 = vunpack.c.h.b16 %v1991
          %v2036 = vunpack.c.l.b16 %v1992
          %v2037 = vunpack.c.h.b16 %v1992
          %v2038 = vunpack.c.l.b16 %v1993
          %v2039 = vunpack.c.h.b16 %v1993
          %v2040 = vunpack.c.l.b16 %v1994
          %v2041 = vunpack.c.h.b16 %v1994
          %v2042 = vunpack.c.l.b16 %v1995
          %v2043 = vunpack.c.h.b16 %v1995
          %v2044 = vpack.c.b16 %v2012, %v2012
          %v2045 = vpack.c.b16 %v2013, %v2013
          %v2046 = vpack.c.b16 %v2014, %v2014
          %v2047 = vpack.c.b16 %v2015, %v2015
          %v2048 = vpack.c.b16 %v2016, %v2016
          %v2049 = vpack.c.b16 %v2017, %v2017
          %v2050 = vpack.c.b16 %v2018, %v2018
          %v2051 = vpack.c.b16 %v2019, %v2019
          %v2052 = vpack.c.b16 %v2020, %v2020
          %v2053 = vpack.c.b16 %v2021, %v2021
          %v2054 = vpack.c.b16 %v2022, %v2022
          %v2055 = vpack.c.b16 %v2023, %v2023
          %v2056 = vpack.c.b16 %v2024, %v2024
          %v2057 = vpack.c.b16 %v2025, %v2025
          %v2058 = vpack.c.b16 %v2026, %v2026
          %v2059 = vpack.c.b16 %v2027, %v2027
          %v2060 = vpack.c.b16 %v2028, %v2028
          %v2061 = vpack.c.b16 %v2029, %v2029
          %v2062 = vpack.c.b16 %v2030, %v2030
          %v2063 = vpack.c.b16 %v2031, %v2031
          %v2064 = vpack.c.b16 %v2032, %v2032
          %v2065 = vpack.c.b16 %v2033, %v2033
          %v2066 = vpack.c.b16 %v2034, %v2034
          %v2067 = vpack.c.b16 %v2035, %v2035
          %v2068 = vpack.c.b16 %v2036, %v2036
          %v2069 = vpack.c.b16 %v2037, %v2037
          %v2070 = vpack.c.b16 %v2038, %v2038
          %v2071 = vpack.c.b16 %v2039, %v2039
          %v2072 = vpack.c.b16 %v2040, %v2040
          %v2073 = vpack.c.b16 %v2041, %v2041
          %v2074 = vpack.c.b16 %v2042, %v2042
          %v2075 = vpack.c.b16 %v2043, %v2043
          %2076 = vrot.lane.b32.xlu0 %v2044, 28
          %v2077 = vpop.permute.xlu0 %2076
          %2078 = vrot.lane.b32.xlu0 %v2045, 28
          %v2079 = vpop.permute.xlu0 %2078
          %2080 = vrot.lane.b32.xlu0 %v2046, 28
          %v2081 = vpop.permute.xlu0 %2080
          %2082 = vrot.lane.b32.xlu0 %v2047, 28
          %v2083 = vpop.permute.xlu0 %2082
          %2084 = vrot.lane.b32.xlu0 %v2048, 28
          %v2085 = vpop.permute.xlu0 %2084
          %2086 = vrot.lane.b32.xlu0 %v2049, 28
          %v2087 = vpop.permute.xlu0 %2086
          %2088 = vrot.lane.b32.xlu0 %v2050, 28
          %v2089 = vpop.permute.xlu0 %2088
          %2090 = vrot.lane.b32.xlu0 %v2051, 28
          %v2091 = vpop.permute.xlu0 %2090
          %2092 = vrot.lane.b32.xlu0 %v2052, 28
          %v2093 = vpop.permute.xlu0 %2092
          %2094 = vrot.lane.b32.xlu0 %v2053, 28
          %v2095 = vpop.permute.xlu0 %2094
          %2096 = vrot.lane.b32.xlu0 %v2054, 28
          %v2097 = vpop.permute.xlu0 %2096
          %2098 = vrot.lane.b32.xlu0 %v2055, 28
          %v2099 = vpop.permute.xlu0 %2098
          %2100 = vrot.lane.b32.xlu0 %v2056, 28
          %v2101 = vpop.permute.xlu0 %2100
          %2102 = vrot.lane.b32.xlu0 %v2057, 28
          %v2103 = vpop.permute.xlu0 %2102
          %2104 = vrot.lane.b32.xlu0 %v2058, 28
          %v2105 = vpop.permute.xlu0 %2104
          %2106 = vrot.lane.b32.xlu0 %v2059, 28
          %v2107 = vpop.permute.xlu0 %2106
          %2108 = vrot.lane.b32.xlu0 %v2060, 28
          %v2109 = vpop.permute.xlu0 %2108
          %2110 = vrot.lane.b32.xlu0 %v2061, 28
          %v2111 = vpop.permute.xlu0 %2110
          %2112 = vrot.lane.b32.xlu0 %v2062, 28
          %v2113 = vpop.permute.xlu0 %2112
          %2114 = vrot.lane.b32.xlu0 %v2063, 28
          %v2115 = vpop.permute.xlu0 %2114
          %2116 = vrot.lane.b32.xlu0 %v2064, 28
          %v2117 = vpop.permute.xlu0 %2116
          %2118 = vrot.lane.b32.xlu0 %v2065, 28
          %v2119 = vpop.permute.xlu0 %2118
          %2120 = vrot.lane.b32.xlu0 %v2066, 28
          %v2121 = vpop.permute.xlu0 %2120
          %2122 = vrot.lane.b32.xlu0 %v2067, 28
          %v2123 = vpop.permute.xlu0 %2122
          %2124 = vrot.lane.b32.xlu0 %v2068, 28
          %v2125 = vpop.permute.xlu0 %2124
          %2126 = vrot.lane.b32.xlu0 %v2069, 28
          %v2127 = vpop.permute.xlu0 %2126
          %2128 = vrot.lane.b32.xlu0 %v2070, 28
          %v2129 = vpop.permute.xlu0 %2128
          %2130 = vrot.lane.b32.xlu0 %v2071, 28
          %v2131 = vpop.permute.xlu0 %2130
          %2132 = vrot.lane.b32.xlu0 %v2072, 28
          %v2133 = vpop.permute.xlu0 %2132
          %2134 = vrot.lane.b32.xlu0 %v2073, 28
          %v2135 = vpop.permute.xlu0 %2134
          %2136 = vrot.lane.b32.xlu0 %v2074, 28
          %v2137 = vpop.permute.xlu0 %2136
          %2138 = vrot.lane.b32.xlu0 %v2075, 28
          %v2139 = vpop.permute.xlu0 %2138
          %vm2172 = vcmask 257248
          %2173 = vst.msk [vmem:[#allocation2] sm:$0xf] %vm2172, %v2077
          %2174 = vst.msk [vmem:[#allocation2 + $0x4] sm:$0xf] %vm2172, %v2079
          %2175 = vst.msk [vmem:[#allocation2 + $0x8] sm:$0xf] %vm2172, %v2081
          %2176 = vst.msk [vmem:[#allocation2 + $0xc] sm:$0xf] %vm2172, %v2083
          %2177 = vst.msk [vmem:[#allocation2 + $0x10] sm:$0xf] %vm2172, %v2085
          %2178 = vst.msk [vmem:[#allocation2 + $0x14] sm:$0xf] %vm2172, %v2087
          %2179 = vst.msk [vmem:[#allocation2 + $0x18] sm:$0xf] %vm2172, %v2089
          %2180 = vst.msk [vmem:[#allocation2 + $0x1c] sm:$0xf] %vm2172, %v2091
          %2181 = vst.msk [vmem:[#allocation2 + $0x20] sm:$0xf] %vm2172, %v2093
          %2182 = vst.msk [vmem:[#allocation2 + $0x24] sm:$0xf] %vm2172, %v2095
          %2183 = vst.msk [vmem:[#allocation2 + $0x28] sm:$0xf] %vm2172, %v2097
          %2184 = vst.msk [vmem:[#allocation2 + $0x2c] sm:$0xf] %vm2172, %v2099
          %2185 = vst.msk [vmem:[#allocation2 + $0x30] sm:$0xf] %vm2172, %v2101
          %2186 = vst.msk [vmem:[#allocation2 + $0x34] sm:$0xf] %vm2172, %v2103
          %2187 = vst.msk [vmem:[#allocation2 + $0x38] sm:$0xf] %vm2172, %v2105
          %2188 = vst.msk [vmem:[#allocation2 + $0x3c] sm:$0xf] %vm2172, %v2107
          %2189 = vst.msk [vmem:[#allocation2 + $0x40] sm:$0xf] %vm2172, %v2109
          %2190 = vst.msk [vmem:[#allocation2 + $0x44] sm:$0xf] %vm2172, %v2111
          %2191 = vst.msk [vmem:[#allocation2 + $0x48] sm:$0xf] %vm2172, %v2113
          %2192 = vst.msk [vmem:[#allocation2 + $0x4c] sm:$0xf] %vm2172, %v2115
          %2193 = vst.msk [vmem:[#allocation2 + $0x50] sm:$0xf] %vm2172, %v2117
          %2194 = vst.msk [vmem:[#allocation2 + $0x54] sm:$0xf] %vm2172, %v2119
          %2195 = vst.msk [vmem:[#allocation2 + $0x58] sm:$0xf] %vm2172, %v2121
          %2196 = vst.msk [vmem:[#allocation2 + $0x5c] sm:$0xf] %vm2172, %v2123
          %2197 = vst.msk [vmem:[#allocation2 + $0x60] sm:$0xf] %vm2172, %v2125
          %2198 = vst.msk [vmem:[#allocation2 + $0x64] sm:$0xf] %vm2172, %v2127
          %2199 = vst.msk [vmem:[#allocation2 + $0x68] sm:$0xf] %vm2172, %v2129
          %2200 = vst.msk [vmem:[#allocation2 + $0x6c] sm:$0xf] %vm2172, %v2131
          %2201 = vst.msk [vmem:[#allocation2 + $0x70] sm:$0xf] %vm2172, %v2133
          %2202 = vst.msk [vmem:[#allocation2 + $0x74] sm:$0xf] %vm2172, %v2135
          %2203 = vst.msk [vmem:[#allocation2 + $0x78] sm:$0xf] %vm2172, %v2137
          %2204 = vst.msk [vmem:[#allocation2 + $0x7c] sm:$0xf] %vm2172, %v2139
          %v2205 = vld [vmem:[%s1690 + $0x2] sm:$0xff]
          %v2206 = vld [vmem:[%s1690 + $0xa] sm:$0xff]
          %v2207 = vld [vmem:[%s1690 + $0x1a] sm:$0xff]
          %v2208 = vld [vmem:[%s1690 + $0x22] sm:$0xff]
          %v2209 = vld [vmem:[%s1690 + $0x32] sm:$0xff]
          %v2210 = vld [vmem:[%s1690 + $0x3a] sm:$0xff]
          %v2211 = vld [vmem:[%s1690 + $0x4a] sm:$0xff]
          %v2212 = vld [vmem:[%s1690 + $0x52] sm:$0xff]
          %v2213 = vld [vmem:[%s1690 + $0x62] sm:$0xff]
          %v2214 = vld [vmem:[%s1690 + $0x6a] sm:$0xff]
          %v2215 = vld [vmem:[%s1690 + $0x7a] sm:$0xff]
          %v2216 = vld [vmem:[%s1690 + $0x82] sm:$0xff]
          %v2217 = vld [vmem:[%s1690 + $0x92] sm:$0xff]
          %v2218 = vld [vmem:[%s1690 + $0x9a] sm:$0xff]
          %v2219 = vld [vmem:[%s1690 + $0xaa] sm:$0xff]
          %v2220 = vld [vmem:[%s1690 + $0xb2] sm:$0xff]
          %v2221 = vld [vmem:[%s1690 + $0xc2] sm:$0xff]
          %v2222 = vld [vmem:[%s1690 + $0xca] sm:$0xff]
          %v2223 = vld [vmem:[%s1690 + $0xda] sm:$0xff]
          %v2224 = vld [vmem:[%s1690 + $0xe2] sm:$0xff]
          %v2225 = vld [vmem:[%s1690 + $0xf2] sm:$0xff]
          %v2226 = vld [vmem:[%s1690 + $0xfa] sm:$0xff]
          %v2227 = vld [vmem:[%s1690 + $0x10a] sm:$0xff]
          %v2228 = vld [vmem:[%s1690 + $0x112] sm:$0xff]
          %v2229 = vld [vmem:[%s1690 + $0x122] sm:$0xff]
          %v2230 = vld [vmem:[%s1690 + $0x12a] sm:$0xff]
          %v2231 = vld [vmem:[%s1690 + $0x13a] sm:$0xff]
          %v2232 = vld [vmem:[%s1690 + $0x142] sm:$0xff]
          %v2233 = vld [vmem:[%s1690 + $0x152] sm:$0xff]
          %v2234 = vld [vmem:[%s1690 + $0x15a] sm:$0xff]
          %v2235 = vld [vmem:[%s1690 + $0x16a] sm:$0xff]
          %v2236 = vld [vmem:[%s1690 + $0x172] sm:$0xff]
          %v2237 = vpack.c.bf16 %v2206, %v2205
          %v2238 = vpack.c.bf16 %v2208, %v2207
          %v2239 = vpack.c.bf16 %v2210, %v2209
          %v2240 = vpack.c.bf16 %v2212, %v2211
          %v2241 = vpack.c.bf16 %v2214, %v2213
          %v2242 = vpack.c.bf16 %v2216, %v2215
          %v2243 = vpack.c.bf16 %v2218, %v2217
          %v2244 = vpack.c.bf16 %v2220, %v2219
          %v2245 = vpack.c.bf16 %v2222, %v2221
          %v2246 = vpack.c.bf16 %v2224, %v2223
          %v2247 = vpack.c.bf16 %v2226, %v2225
          %v2248 = vpack.c.bf16 %v2228, %v2227
          %v2249 = vpack.c.bf16 %v2230, %v2229
          %v2250 = vpack.c.bf16 %v2232, %v2231
          %v2251 = vpack.c.bf16 %v2234, %v2233
          %v2252 = vpack.c.bf16 %v2236, %v2235
          %v2269 = vunpack.c.l.b16 %v2237
          %v2270 = vunpack.c.h.b16 %v2237
          %v2271 = vunpack.c.l.b16 %v2238
          %v2272 = vunpack.c.h.b16 %v2238
          %v2273 = vunpack.c.l.b16 %v2239
          %v2274 = vunpack.c.h.b16 %v2239
          %v2275 = vunpack.c.l.b16 %v2240
          %v2276 = vunpack.c.h.b16 %v2240
          %v2277 = vunpack.c.l.b16 %v2241
          %v2278 = vunpack.c.h.b16 %v2241
          %v2279 = vunpack.c.l.b16 %v2242
          %v2280 = vunpack.c.h.b16 %v2242
          %v2281 = vunpack.c.l.b16 %v2243
          %v2282 = vunpack.c.h.b16 %v2243
          %v2283 = vunpack.c.l.b16 %v2244
          %v2284 = vunpack.c.h.b16 %v2244
          %v2285 = vunpack.c.l.b16 %v2245
          %v2286 = vunpack.c.h.b16 %v2245
          %v2287 = vunpack.c.l.b16 %v2246
          %v2288 = vunpack.c.h.b16 %v2246
          %v2289 = vunpack.c.l.b16 %v2247
          %v2290 = vunpack.c.h.b16 %v2247
          %v2291 = vunpack.c.l.b16 %v2248
          %v2292 = vunpack.c.h.b16 %v2248
          %v2293 = vunpack.c.l.b16 %v2249
          %v2294 = vunpack.c.h.b16 %v2249
          %v2295 = vunpack.c.l.b16 %v2250
          %v2296 = vunpack.c.h.b16 %v2250
          %v2297 = vunpack.c.l.b16 %v2251
          %v2298 = vunpack.c.h.b16 %v2251
          %v2299 = vunpack.c.l.b16 %v2252
          %v2300 = vunpack.c.h.b16 %v2252
          %v2301 = vpack.c.b16 %v2269, %v2269
          %v2302 = vpack.c.b16 %v2270, %v2270
          %v2303 = vpack.c.b16 %v2271, %v2271
          %v2304 = vpack.c.b16 %v2272, %v2272
          %v2305 = vpack.c.b16 %v2273, %v2273
          %v2306 = vpack.c.b16 %v2274, %v2274
          %v2307 = vpack.c.b16 %v2275, %v2275
          %v2308 = vpack.c.b16 %v2276, %v2276
          %v2309 = vpack.c.b16 %v2277, %v2277
          %v2310 = vpack.c.b16 %v2278, %v2278
          %v2311 = vpack.c.b16 %v2279, %v2279
          %v2312 = vpack.c.b16 %v2280, %v2280
          %v2313 = vpack.c.b16 %v2281, %v2281
          %v2314 = vpack.c.b16 %v2282, %v2282
          %v2315 = vpack.c.b16 %v2283, %v2283
          %v2316 = vpack.c.b16 %v2284, %v2284
          %v2317 = vpack.c.b16 %v2285, %v2285
          %v2318 = vpack.c.b16 %v2286, %v2286
          %v2319 = vpack.c.b16 %v2287, %v2287
          %v2320 = vpack.c.b16 %v2288, %v2288
          %v2321 = vpack.c.b16 %v2289, %v2289
          %v2322 = vpack.c.b16 %v2290, %v2290
          %v2323 = vpack.c.b16 %v2291, %v2291
          %v2324 = vpack.c.b16 %v2292, %v2292
          %v2325 = vpack.c.b16 %v2293, %v2293
          %v2326 = vpack.c.b16 %v2294, %v2294
          %v2327 = vpack.c.b16 %v2295, %v2295
          %v2328 = vpack.c.b16 %v2296, %v2296
          %v2329 = vpack.c.b16 %v2297, %v2297
          %v2330 = vpack.c.b16 %v2298, %v2298
          %v2331 = vpack.c.b16 %v2299, %v2299
          %v2332 = vpack.c.b16 %v2300, %v2300
          %2333 = vrot.lane.b32.xlu0 %v2301, 32
          %v2334 = vpop.permute.xlu0 %2333
          %2335 = vrot.lane.b32.xlu0 %v2302, 32
          %v2336 = vpop.permute.xlu0 %2335
          %2337 = vrot.lane.b32.xlu0 %v2303, 32
          %v2338 = vpop.permute.xlu0 %2337
          %2339 = vrot.lane.b32.xlu0 %v2304, 32
          %v2340 = vpop.permute.xlu0 %2339
          %2341 = vrot.lane.b32.xlu0 %v2305, 32
          %v2342 = vpop.permute.xlu0 %2341
          %2343 = vrot.lane.b32.xlu0 %v2306, 32
          %v2344 = vpop.permute.xlu0 %2343
          %2345 = vrot.lane.b32.xlu0 %v2307, 32
          %v2346 = vpop.permute.xlu0 %2345
          %2347 = vrot.lane.b32.xlu0 %v2308, 32
          %v2348 = vpop.permute.xlu0 %2347
          %2349 = vrot.lane.b32.xlu0 %v2309, 32
          %v2350 = vpop.permute.xlu0 %2349
          %2351 = vrot.lane.b32.xlu0 %v2310, 32
          %v2352 = vpop.permute.xlu0 %2351
          %2353 = vrot.lane.b32.xlu0 %v2311, 32
          %v2354 = vpop.permute.xlu0 %2353
          %2355 = vrot.lane.b32.xlu0 %v2312, 32
          %v2356 = vpop.permute.xlu0 %2355
          %2357 = vrot.lane.b32.xlu0 %v2313, 32
          %v2358 = vpop.permute.xlu0 %2357
          %2359 = vrot.lane.b32.xlu0 %v2314, 32
          %v2360 = vpop.permute.xlu0 %2359
          %2361 = vrot.lane.b32.xlu0 %v2315, 32
          %v2362 = vpop.permute.xlu0 %2361
          %2363 = vrot.lane.b32.xlu0 %v2316, 32
          %v2364 = vpop.permute.xlu0 %2363
          %2365 = vrot.lane.b32.xlu0 %v2317, 32
          %v2366 = vpop.permute.xlu0 %2365
          %2367 = vrot.lane.b32.xlu0 %v2318, 32
          %v2368 = vpop.permute.xlu0 %2367
          %2369 = vrot.lane.b32.xlu0 %v2319, 32
          %v2370 = vpop.permute.xlu0 %2369
          %2371 = vrot.lane.b32.xlu0 %v2320, 32
          %v2372 = vpop.permute.xlu0 %2371
          %2373 = vrot.lane.b32.xlu0 %v2321, 32
          %v2374 = vpop.permute.xlu0 %2373
          %2375 = vrot.lane.b32.xlu0 %v2322, 32
          %v2376 = vpop.permute.xlu0 %2375
          %2377 = vrot.lane.b32.xlu0 %v2323, 32
          %v2378 = vpop.permute.xlu0 %2377
          %2379 = vrot.lane.b32.xlu0 %v2324, 32
          %v2380 = vpop.permute.xlu0 %2379
          %2381 = vrot.lane.b32.xlu0 %v2325, 32
          %v2382 = vpop.permute.xlu0 %2381
          %2383 = vrot.lane.b32.xlu0 %v2326, 32
          %v2384 = vpop.permute.xlu0 %2383
          %2385 = vrot.lane.b32.xlu0 %v2327, 32
          %v2386 = vpop.permute.xlu0 %2385
          %2387 = vrot.lane.b32.xlu0 %v2328, 32
          %v2388 = vpop.permute.xlu0 %2387
          %2389 = vrot.lane.b32.xlu0 %v2329, 32
          %v2390 = vpop.permute.xlu0 %2389
          %2391 = vrot.lane.b32.xlu0 %v2330, 32
          %v2392 = vpop.permute.xlu0 %2391
          %2393 = vrot.lane.b32.xlu0 %v2331, 32
          %v2394 = vpop.permute.xlu0 %2393
          %2395 = vrot.lane.b32.xlu0 %v2332, 32
          %v2396 = vpop.permute.xlu0 %2395
          %vm2429 = vcmask 290048
          %2430 = vst.msk [vmem:[#allocation2] sm:$0xf] %vm2429, %v2334
          %2431 = vst.msk [vmem:[#allocation2 + $0x4] sm:$0xf] %vm2429, %v2336
          %2432 = vst.msk [vmem:[#allocation2 + $0x8] sm:$0xf] %vm2429, %v2338
          %2433 = vst.msk [vmem:[#allocation2 + $0xc] sm:$0xf] %vm2429, %v2340
          %2434 = vst.msk [vmem:[#allocation2 + $0x10] sm:$0xf] %vm2429, %v2342
          %2435 = vst.msk [vmem:[#allocation2 + $0x14] sm:$0xf] %vm2429, %v2344
          %2436 = vst.msk [vmem:[#allocation2 + $0x18] sm:$0xf] %vm2429, %v2346
          %2437 = vst.msk [vmem:[#allocation2 + $0x1c] sm:$0xf] %vm2429, %v2348
          %2438 = vst.msk [vmem:[#allocation2 + $0x20] sm:$0xf] %vm2429, %v2350
          %2439 = vst.msk [vmem:[#allocation2 + $0x24] sm:$0xf] %vm2429, %v2352
          %2440 = vst.msk [vmem:[#allocation2 + $0x28] sm:$0xf] %vm2429, %v2354
          %2441 = vst.msk [vmem:[#allocation2 + $0x2c] sm:$0xf] %vm2429, %v2356
          %2442 = vst.msk [vmem:[#allocation2 + $0x30] sm:$0xf] %vm2429, %v2358
          %2443 = vst.msk [vmem:[#allocation2 + $0x34] sm:$0xf] %vm2429, %v2360
          %2444 = vst.msk [vmem:[#allocation2 + $0x38] sm:$0xf] %vm2429, %v2362
          %2445 = vst.msk [vmem:[#allocation2 + $0x3c] sm:$0xf] %vm2429, %v2364
          %2446 = vst.msk [vmem:[#allocation2 + $0x40] sm:$0xf] %vm2429, %v2366
          %2447 = vst.msk [vmem:[#allocation2 + $0x44] sm:$0xf] %vm2429, %v2368
          %2448 = vst.msk [vmem:[#allocation2 + $0x48] sm:$0xf] %vm2429, %v2370
          %2449 = vst.msk [vmem:[#allocation2 + $0x4c] sm:$0xf] %vm2429, %v2372
          %2450 = vst.msk [vmem:[#allocation2 + $0x50] sm:$0xf] %vm2429, %v2374
          %2451 = vst.msk [vmem:[#allocation2 + $0x54] sm:$0xf] %vm2429, %v2376
          %2452 = vst.msk [vmem:[#allocation2 + $0x58] sm:$0xf] %vm2429, %v2378
          %2453 = vst.msk [vmem:[#allocation2 + $0x5c] sm:$0xf] %vm2429, %v2380
          %2454 = vst.msk [vmem:[#allocation2 + $0x60] sm:$0xf] %vm2429, %v2382
          %2455 = vst.msk [vmem:[#allocation2 + $0x64] sm:$0xf] %vm2429, %v2384
          %2456 = vst.msk [vmem:[#allocation2 + $0x68] sm:$0xf] %vm2429, %v2386
          %2457 = vst.msk [vmem:[#allocation2 + $0x6c] sm:$0xf] %vm2429, %v2388
          %2458 = vst.msk [vmem:[#allocation2 + $0x70] sm:$0xf] %vm2429, %v2390
          %2459 = vst.msk [vmem:[#allocation2 + $0x74] sm:$0xf] %vm2429, %v2392
          %2460 = vst.msk [vmem:[#allocation2 + $0x78] sm:$0xf] %vm2429, %v2394
          %2461 = vst.msk [vmem:[#allocation2 + $0x7c] sm:$0xf] %vm2429, %v2396
        $region32: #{tpu_custom_call.1} parent=27 // pred_fallthru
          _
        %v2462 = vld [vmem:[#allocation2] sm:$0xf]
        %v2463 = vld [vmem:[#allocation2 + $0x4] sm:$0xf]
        %v2464 = vld [vmem:[#allocation2 + $0x8] sm:$0xf]
        %v2465 = vld [vmem:[#allocation2 + $0xc] sm:$0xf]
        %v2466 = vld [vmem:[#allocation2 + $0x10] sm:$0xf]
        %v2467 = vld [vmem:[#allocation2 + $0x14] sm:$0xf]
        %v2468 = vld [vmem:[#allocation2 + $0x18] sm:$0xf]
        %v2469 = vld [vmem:[#allocation2 + $0x1c] sm:$0xf]
        %v2470 = vld [vmem:[#allocation2 + $0x20] sm:$0xf]
        %v2471 = vld [vmem:[#allocation2 + $0x24] sm:$0xf]
        %v2472 = vld [vmem:[#allocation2 + $0x28] sm:$0xf]
        %v2473 = vld [vmem:[#allocation2 + $0x2c] sm:$0xf]
        %v2474 = vld [vmem:[#allocation2 + $0x30] sm:$0xf]
        %v2475 = vld [vmem:[#allocation2 + $0x34] sm:$0xf]
        %v2476 = vld [vmem:[#allocation2 + $0x38] sm:$0xf]
        %v2477 = vld [vmem:[#allocation2 + $0x3c] sm:$0xf]
        %v2478 = vld [vmem:[#allocation2 + $0x40] sm:$0xf]
        %v2479 = vld [vmem:[#allocation2 + $0x44] sm:$0xf]
        %v2480 = vld [vmem:[#allocation2 + $0x48] sm:$0xf]
        %v2481 = vld [vmem:[#allocation2 + $0x4c] sm:$0xf]
        %v2482 = vld [vmem:[#allocation2 + $0x50] sm:$0xf]
        %v2483 = vld [vmem:[#allocation2 + $0x54] sm:$0xf]
        %v2484 = vld [vmem:[#allocation2 + $0x58] sm:$0xf]
        %v2485 = vld [vmem:[#allocation2 + $0x5c] sm:$0xf]
        %v2486 = vld [vmem:[#allocation2 + $0x60] sm:$0xf]
        %v2487 = vld [vmem:[#allocation2 + $0x64] sm:$0xf]
        %v2488 = vld [vmem:[#allocation2 + $0x68] sm:$0xf]
        %v2489 = vld [vmem:[#allocation2 + $0x6c] sm:$0xf]
        %v2490 = vld [vmem:[#allocation2 + $0x70] sm:$0xf]
        %v2491 = vld [vmem:[#allocation2 + $0x74] sm:$0xf]
        %v2492 = vld [vmem:[#allocation2 + $0x78] sm:$0xf]
        %v2493 = vld [vmem:[#allocation2 + $0x7c] sm:$0xf]
        %v2494 = vld [vmem:[%s172] sm:$0xf]
        %v2495 = vld [vmem:[%s172 + $0x4] sm:$0xf]
        %v2496 = vld [vmem:[%s172 + $0x8] sm:$0xf]
        %v2497 = vld [vmem:[%s172 + $0xc] sm:$0xf]
        %v2498 = vld [vmem:[%s172 + $0x10] sm:$0xf]
        %v2499 = vld [vmem:[%s172 + $0x14] sm:$0xf]
        %v2500 = vld [vmem:[%s172 + $0x18] sm:$0xf]
        %v2501 = vld [vmem:[%s172 + $0x1c] sm:$0xf]
        %v2502 = vld [vmem:[%s172 + $0x20] sm:$0xf]
        %v2503 = vld [vmem:[%s172 + $0x24] sm:$0xf]
        %v2504 = vld [vmem:[%s172 + $0x28] sm:$0xf]
        %v2505 = vld [vmem:[%s172 + $0x2c] sm:$0xf]
        %v2506 = vld [vmem:[%s172 + $0x30] sm:$0xf]
        %v2507 = vld [vmem:[%s172 + $0x34] sm:$0xf]
        %v2508 = vld [vmem:[%s172 + $0x38] sm:$0xf]
        %v2509 = vld [vmem:[%s172 + $0x3c] sm:$0xf]
        %v2542 = vunpack.c.l.b16 %v2462
        %v2543 = vunpack.c.l.b16 %v2463
        %v2544 = vunpack.c.l.b16 %v2464
        %v2545 = vunpack.c.l.b16 %v2465
        %v2546 = vunpack.c.l.b16 %v2466
        %v2547 = vunpack.c.l.b16 %v2467
        %v2548 = vunpack.c.l.b16 %v2468
        %v2549 = vunpack.c.l.b16 %v2469
        %v2550 = vunpack.c.l.b16 %v2470
        %v2551 = vunpack.c.l.b16 %v2471
        %v2552 = vunpack.c.l.b16 %v2472
        %v2553 = vunpack.c.l.b16 %v2473
        %v2554 = vunpack.c.l.b16 %v2474
        %v2555 = vunpack.c.l.b16 %v2475
        %v2556 = vunpack.c.l.b16 %v2476
        %v2557 = vunpack.c.l.b16 %v2477
        %v2558 = vunpack.c.l.b16 %v2478
        %v2559 = vunpack.c.l.b16 %v2479
        %v2560 = vunpack.c.l.b16 %v2480
        %v2561 = vunpack.c.l.b16 %v2481
        %v2562 = vunpack.c.l.b16 %v2482
        %v2563 = vunpack.c.l.b16 %v2483
        %v2564 = vunpack.c.l.b16 %v2484
        %v2565 = vunpack.c.l.b16 %v2485
        %v2566 = vunpack.c.l.b16 %v2486
        %v2567 = vunpack.c.l.b16 %v2487
        %v2568 = vunpack.c.l.b16 %v2488
        %v2569 = vunpack.c.l.b16 %v2489
        %v2570 = vunpack.c.l.b16 %v2490
        %v2571 = vunpack.c.l.b16 %v2491
        %v2572 = vunpack.c.l.b16 %v2492
        %v2573 = vunpack.c.l.b16 %v2493
        %v2574 = vpack.c.b16 %v2543, %v2542
        %v2575 = vpack.c.b16 %v2545, %v2544
        %v2576 = vpack.c.b16 %v2547, %v2546
        %v2577 = vpack.c.b16 %v2549, %v2548
        %v2578 = vpack.c.b16 %v2551, %v2550
        %v2579 = vpack.c.b16 %v2553, %v2552
        %v2580 = vpack.c.b16 %v2555, %v2554
        %v2581 = vpack.c.b16 %v2557, %v2556
        %v2582 = vpack.c.b16 %v2559, %v2558
        %v2583 = vpack.c.b16 %v2561, %v2560
        %v2584 = vpack.c.b16 %v2563, %v2562
        %v2585 = vpack.c.b16 %v2565, %v2564
        %v2586 = vpack.c.b16 %v2567, %v2566
        %v2587 = vpack.c.b16 %v2569, %v2568
        %v2588 = vpack.c.b16 %v2571, %v2570
        %v2589 = vpack.c.b16 %v2573, %v2572
        %v2622 = vunpack.c.l.b16 %v2494
        %v2623 = vunpack.c.l.b16 %v2495
        %v2624 = vunpack.c.l.b16 %v2496
        %v2625 = vunpack.c.l.b16 %v2497
        %v2626 = vunpack.c.l.b16 %v2498
        %v2627 = vunpack.c.l.b16 %v2499
        %v2628 = vunpack.c.l.b16 %v2500
        %v2629 = vunpack.c.l.b16 %v2501
        %v2630 = vunpack.c.l.b16 %v2502
        %v2631 = vunpack.c.l.b16 %v2503
        %v2632 = vunpack.c.l.b16 %v2504
        %v2633 = vunpack.c.l.b16 %v2505
        %v2634 = vunpack.c.l.b16 %v2506
        %v2635 = vunpack.c.l.b16 %v2507
        %v2636 = vunpack.c.l.b16 %v2508
        %v2637 = vunpack.c.l.b16 %v2509
        %v2638 = vpack.c.b16 %v2623, %v2622
        %v2639 = vpack.c.b16 %v2625, %v2624
        %v2640 = vpack.c.b16 %v2627, %v2626
        %v2641 = vpack.c.b16 %v2629, %v2628
        %v2642 = vpack.c.b16 %v2631, %v2630
        %v2643 = vpack.c.b16 %v2633, %v2632
        %v2644 = vpack.c.b16 %v2635, %v2634
        %v2645 = vpack.c.b16 %v2637, %v2636
        %2654 = vmatprep.subr.bf16.mxu0 0
        %2655 = vmatpush1.bf16.msra.mxu0 %v2645
        %2656 = vmatprep.subr.bf16.mxu0 0
        %2657 = vmatpush1.bf16.msra.mxu0 %v2644
        %2658 = vmatprep.subr.bf16.mxu0 0
        %2659 = vmatpush1.bf16.msra.mxu0 %v2643
        %2660 = vmatprep.subr.bf16.mxu0 0
        %2661 = vmatpush1.bf16.msra.mxu0 %v2642
        %2662 = vmatprep.subr.bf16.mxu0 0
        %2663 = vmatpush1.bf16.msra.mxu0 %v2641
        %2664 = vmatprep.subr.bf16.mxu0 0
        %2665 = vmatpush1.bf16.msra.mxu0 %v2640
        %2666 = vmatprep.subr.bf16.mxu0 0
        %2667 = vmatpush1.bf16.msra.mxu0 %v2639
        %2668 = vmatprep.subr.bf16.mxu0 0
        %2669 = vmatpush1.bf16.msra.mxu0 %v2638
        %2670 = vmatprep.subr.bf16.mxu0 0
        %2671 = vmatpush2.bf16.msra.mxu0 0
        %2672 = vmatprep.subr.bf16.mxu0 0
        %2673 = vmatpush2.bf16.msra.mxu0 0
        %2674 = vmatprep.subr.bf16.mxu0 0
        %2675 = vmatpush2.bf16.msra.mxu0 0
        %2676 = vmatprep.subr.bf16.mxu0 0
        %2677 = vmatpush2.bf16.msra.mxu0 0
        %2678 = vmatprep.subr.bf16.mxu0 0
        %2679 = vmatpush2.bf16.msra.mxu0 0
        %2680 = vmatprep.subr.bf16.mxu0 0
        %2681 = vmatpush2.bf16.msra.mxu0 0
        %2682 = vmatprep.subr.bf16.mxu0 0
        %2683 = vmatpush2.bf16.msra.mxu0 0
        %2684 = vmatprep.subr.bf16.mxu0 0
        %2685 = vmatpush2.bf16.msra.mxu0 0
        %2686 = vmatprep.mubr.bf16.mxu0 0
        %2687 = vmatmul.mubr.bf16.gmra.mxu0 %v2574
        %v2688 = vpop.f32.mrf.mxu0
        %v2689 = vadd.f32 0.0, %v2688
        %v2690 = vpop.f32.mrf.mxu0
        %v2691 = vpop.f32.mrf.mxu0
        %v2692 = vadd.f32 0.0, %v2691
        %v2693 = vpop.f32.mrf.mxu0
        %2694 = vmatprep.mubr.bf16.mxu0 0
        %2695 = vmatmul.mubr.bf16.gmra.mxu0 %v2575
        %v2696 = vpop.f32.mrf.mxu0
        %v2697 = vadd.f32 0.0, %v2696
        %v2698 = vpop.f32.mrf.mxu0
        %v2699 = vpop.f32.mrf.mxu0
        %v2700 = vadd.f32 0.0, %v2699
        %v2701 = vpop.f32.mrf.mxu0
        %2702 = vmatprep.mubr.bf16.mxu0 0
        %2703 = vmatmul.mubr.bf16.gmra.mxu0 %v2576
        %v2704 = vpop.f32.mrf.mxu0
        %v2705 = vadd.f32 0.0, %v2704
        %v2706 = vpop.f32.mrf.mxu0
        %v2707 = vpop.f32.mrf.mxu0
        %v2708 = vadd.f32 0.0, %v2707
        %v2709 = vpop.f32.mrf.mxu0
        %2710 = vmatprep.mubr.bf16.mxu0 0
        %2711 = vmatmul.mubr.bf16.gmra.mxu0 %v2577
        %v2712 = vpop.f32.mrf.mxu0
        %v2713 = vadd.f32 0.0, %v2712
        %v2714 = vpop.f32.mrf.mxu0
        %v2715 = vpop.f32.mrf.mxu0
        %v2716 = vadd.f32 0.0, %v2715
        %v2717 = vpop.f32.mrf.mxu0
        %2718 = vmatprep.mubr.bf16.mxu0 0
        %2719 = vmatmul.mubr.bf16.gmra.mxu0 %v2578
        %v2720 = vpop.f32.mrf.mxu0
        %v2721 = vadd.f32 0.0, %v2720
        %v2722 = vpop.f32.mrf.mxu0
        %v2723 = vpop.f32.mrf.mxu0
        %v2724 = vadd.f32 0.0, %v2723
        %v2725 = vpop.f32.mrf.mxu0
        %2726 = vmatprep.mubr.bf16.mxu0 0
        %2727 = vmatmul.mubr.bf16.gmra.mxu0 %v2579
        %v2728 = vpop.f32.mrf.mxu0
        %v2729 = vadd.f32 0.0, %v2728
        %v2730 = vpop.f32.mrf.mxu0
        %v2731 = vpop.f32.mrf.mxu0
        %v2732 = vadd.f32 0.0, %v2731
        %v2733 = vpop.f32.mrf.mxu0
        %2734 = vmatprep.mubr.bf16.mxu0 0
        %2735 = vmatmul.mubr.bf16.gmra.mxu0 %v2580
        %v2736 = vpop.f32.mrf.mxu0
        %v2737 = vadd.f32 0.0, %v2736
        %v2738 = vpop.f32.mrf.mxu0
        %v2739 = vpop.f32.mrf.mxu0
        %v2740 = vadd.f32 0.0, %v2739
        %v2741 = vpop.f32.mrf.mxu0
        %2742 = vmatprep.mubr.bf16.mxu0 0
        %2743 = vmatmul.mubr.bf16.gmra.mxu0 %v2581
        %v2744 = vpop.f32.mrf.mxu0
        %v2745 = vadd.f32 0.0, %v2744
        %v2746 = vpop.f32.mrf.mxu0
        %v2747 = vpop.f32.mrf.mxu0
        %v2748 = vadd.f32 0.0, %v2747
        %v2749 = vpop.f32.mrf.mxu0
        %2750 = vmatprep.mubr.bf16.mxu0 0
        %2751 = vmatmul.mubr.bf16.gmra.mxu0 %v2582
        %v2752 = vpop.f32.mrf.mxu0
        %v2753 = vadd.f32 0.0, %v2752
        %v2754 = vpop.f32.mrf.mxu0
        %v2755 = vpop.f32.mrf.mxu0
        %v2756 = vadd.f32 0.0, %v2755
        %v2757 = vpop.f32.mrf.mxu0
        %2758 = vmatprep.mubr.bf16.mxu0 0
        %2759 = vmatmul.mubr.bf16.gmra.mxu0 %v2583
        %v2760 = vpop.f32.mrf.mxu0
        %v2761 = vadd.f32 0.0, %v2760
        %v2762 = vpop.f32.mrf.mxu0
        %v2763 = vpop.f32.mrf.mxu0
        %v2764 = vadd.f32 0.0, %v2763
        %v2765 = vpop.f32.mrf.mxu0
        %2766 = vmatprep.mubr.bf16.mxu0 0
        %2767 = vmatmul.mubr.bf16.gmra.mxu0 %v2584
        %v2768 = vpop.f32.mrf.mxu0
        %v2769 = vadd.f32 0.0, %v2768
        %v2770 = vpop.f32.mrf.mxu0
        %v2771 = vpop.f32.mrf.mxu0
        %v2772 = vadd.f32 0.0, %v2771
        %v2773 = vpop.f32.mrf.mxu0
        %2774 = vmatprep.mubr.bf16.mxu0 0
        %2775 = vmatmul.mubr.bf16.gmra.mxu0 %v2585
        %v2776 = vpop.f32.mrf.mxu0
        %v2777 = vadd.f32 0.0, %v2776
        %v2778 = vpop.f32.mrf.mxu0
        %v2779 = vpop.f32.mrf.mxu0
        %v2780 = vadd.f32 0.0, %v2779
        %v2781 = vpop.f32.mrf.mxu0
        %2782 = vmatprep.mubr.bf16.mxu0 0
        %2783 = vmatmul.mubr.bf16.gmra.mxu0 %v2586
        %v2784 = vpop.f32.mrf.mxu0
        %v2785 = vadd.f32 0.0, %v2784
        %v2786 = vpop.f32.mrf.mxu0
        %v2787 = vpop.f32.mrf.mxu0
        %v2788 = vadd.f32 0.0, %v2787
        %v2789 = vpop.f32.mrf.mxu0
        %2790 = vmatprep.mubr.bf16.mxu0 0
        %2791 = vmatmul.mubr.bf16.gmra.mxu0 %v2587
        %v2792 = vpop.f32.mrf.mxu0
        %v2793 = vadd.f32 0.0, %v2792
        %v2794 = vpop.f32.mrf.mxu0
        %v2795 = vpop.f32.mrf.mxu0
        %v2796 = vadd.f32 0.0, %v2795
        %v2797 = vpop.f32.mrf.mxu0
        %2798 = vmatprep.mubr.bf16.mxu0 0
        %2799 = vmatmul.mubr.bf16.gmra.mxu0 %v2588
        %v2800 = vpop.f32.mrf.mxu0
        %v2801 = vadd.f32 0.0, %v2800
        %v2802 = vpop.f32.mrf.mxu0
        %v2803 = vpop.f32.mrf.mxu0
        %v2804 = vadd.f32 0.0, %v2803
        %v2805 = vpop.f32.mrf.mxu0
        %2806 = vmatprep.mubr.bf16.mxu0 0
        %2807 = vmatmul.mubr.bf16.gmra.mxu0 %v2589
        %v2808 = vpop.f32.mrf.mxu0
        %v2809 = vadd.f32 0.0, %v2808
        %v2810 = vpop.f32.mrf.mxu0
        %v2811 = vpop.f32.mrf.mxu0
        %v2812 = vadd.f32 0.0, %v2811
        %v2813 = vpop.f32.mrf.mxu0
        %2814 = vdwg.mxu0
        %2815 = vst [vmem:[%s163] sm:$0xff] %v2689
        %2816 = vst [vmem:[%s163 + $0x8] sm:$0xff] %v2692
        %2817 = vst [vmem:[%s163 + $0x10] sm:$0xff] %v2697
        %2818 = vst [vmem:[%s163 + $0x18] sm:$0xff] %v2700
        %2819 = vst [vmem:[%s163 + $0x20] sm:$0xff] %v2705
        %2820 = vst [vmem:[%s163 + $0x28] sm:$0xff] %v2708
        %2821 = vst [vmem:[%s163 + $0x30] sm:$0xff] %v2713
        %2822 = vst [vmem:[%s163 + $0x38] sm:$0xff] %v2716
        %2823 = vst [vmem:[%s163 + $0x40] sm:$0xff] %v2721
        %2824 = vst [vmem:[%s163 + $0x48] sm:$0xff] %v2724
        %2825 = vst [vmem:[%s163 + $0x50] sm:$0xff] %v2729
        %2826 = vst [vmem:[%s163 + $0x58] sm:$0xff] %v2732
        %2827 = vst [vmem:[%s163 + $0x60] sm:$0xff] %v2737
        %2828 = vst [vmem:[%s163 + $0x68] sm:$0xff] %v2740
        %2829 = vst [vmem:[%s163 + $0x70] sm:$0xff] %v2745
        %2830 = vst [vmem:[%s163 + $0x78] sm:$0xff] %v2748
        %2831 = vst [vmem:[%s163 + $0x80] sm:$0xff] %v2753
        %2832 = vst [vmem:[%s163 + $0x88] sm:$0xff] %v2756
        %2833 = vst [vmem:[%s163 + $0x90] sm:$0xff] %v2761
        %2834 = vst [vmem:[%s163 + $0x98] sm:$0xff] %v2764
        %2835 = vst [vmem:[%s163 + $0xa0] sm:$0xff] %v2769
        %2836 = vst [vmem:[%s163 + $0xa8] sm:$0xff] %v2772
        %2837 = vst [vmem:[%s163 + $0xb0] sm:$0xff] %v2777
        %2838 = vst [vmem:[%s163 + $0xb8] sm:$0xff] %v2780
        %2839 = vst [vmem:[%s163 + $0xc0] sm:$0xff] %v2785
        %2840 = vst [vmem:[%s163 + $0xc8] sm:$0xff] %v2788
        %2841 = vst [vmem:[%s163 + $0xd0] sm:$0xff] %v2793
        %2842 = vst [vmem:[%s163 + $0xd8] sm:$0xff] %v2796
        %2843 = vst [vmem:[%s163 + $0xe0] sm:$0xff] %v2801
        %2844 = vst [vmem:[%s163 + $0xe8] sm:$0xff] %v2804
        %2845 = vst [vmem:[%s163 + $0xf0] sm:$0xff] %v2809
        %2846 = vst [vmem:[%s163 + $0xf8] sm:$0xff] %v2812
        %s2847 = sand.u32 %s90, 1
        %s2848 = scalar_lea.sflag [#allocation4], %s2847
        %s2849 = sand.u32 %s90, 1
        %s2850 = smul.addr %s2849, 256
        %s2851 = scalar_lea.vmem [#allocation3], %s2850
        // Predicated region
        $region33: #{tpu_custom_call.1} parent=27 // pred_check
          %p2852 = pneg %p100
        $region34: #{tpu_custom_call.1} parent=27 // pred_check_branch
          %2854 = sbr.rel (%p2852) target = $region36
        $region35: #{tpu_custom_call.1} parent=27 // pred_region
          %s2856 = ssub.s32 4096, 4096
          %2857 = vsyncadd %s2848, %s2856
          %s2858 = smul.addr %s20, 32
          %s2859 = sadd.s32 %s21, %s2858
          %s2860 = smul.addr %s2859, 128
          %s2861 = scalar_lea.hbm %s2, %s2860
          %s2862 = sshll.u32 %s2851, 4
          %s2863 = int_to_ptr.vmem [resolvable:$true] %s2862
          %2868 = dma.vmem_to_hbm [thread:$0]  %s2863, 4096, %s2861, %s2848, 128, 128, 8
        $region36: #{tpu_custom_call.1} parent=27 // pred_fallthru
          _
      $region28: #{tpu_custom_call.1} parent=5 // pred_fallthru
        _
      %p2869 = scmp.le.s32.totalorder 2, %s11
      // Predicated region
      $region37: #{tpu_custom_call.1} parent=5 // pred_check
        %p2870 = pneg %p2869
      $region38: #{tpu_custom_call.1} parent=5 // pred_check_branch
        %2872 = sbr.rel (%p2870) target = $region40
      $region39: #{tpu_custom_call.1} parent=5 // pred_region
        %s2873 = ssub.s32 %s11, 2
        // Predicated region
        $region41: #{tpu_custom_call.1} parent=39 // pred_check
          %p2874 = pneg %p106
        $region42: #{tpu_custom_call.1} parent=39 // pred_check_branch
          %2876 = sbr.rel (%p2874) target = $region44
        $region43: #{tpu_custom_call.1} parent=39 // pred_region
          %s2877 = sand.u32 %s91, 1
          %s2878 = scalar_lea.sflag [#allocation4], %s2877
          %s2879 = sand.u32 %s91, 1
          %s2880 = smul.addr %s2879, 256
          %s2881 = scalar_lea.vmem [#allocation3], %s2880
          %2882 = dma.done %s2878, 4096
        $region44: #{tpu_custom_call.1} parent=39 // pred_fallthru
          _
      $region40: #{tpu_custom_call.1} parent=5 // pred_fallthru
        _
    $region6: #{tpu_custom_call.1} parent=1 // loop_footer
      %s15 = sadd.s32 1, %s11
    $region7: #{tpu_custom_call.1} parent=1 // loop_footer_branch
      %10 = sbr.rel target = $region3
    $region8: #{tpu_custom_call.1} parent=1 // loop_exit
      _
    %2883 = vsyncpa [#allocation4], 1
    %s2884 = scalar_lea.sflag [#allocation4], 1
    %2885 = vsyncpa %s2884, 1

</llo_original>
